<compile_context>
chip_gen: v7x
topology: tpu7x:2x2x1
jax: 0.10.0
libtpu: 0.0.40
codegen_flags: <defaults>
</compile_context>

<pallas_src>
import functools

import jax
import jax.numpy as jnp
from jax.experimental import pallas as pl
from jax.experimental.pallas import tpu as pltpu

_HIDDEN = (128, 256, 512, 256, 128)


def _round_up(n, m):
    return ((n + m - 1) // m) * m


def _choose_tile_b(batch):
    """Batch tile: big (<=512) to amortize grid-step overhead and MXU drain,
    but >= 2 grid steps when possible so both v7x TensorCores get work."""
    tile = min(512, _round_up(batch, 8))
    while batch > 8 and tile > 8 and pl.cdiv(batch, tile) < 2:
        tile = _round_up(tile // 2, 8)
    return max(tile, 8)


def _mlp_kernel(x_ref,
                w1_ref, w2_ref, w3_ref, w4_ref, w5_ref, w6_ref,
                b_ref, out_ref, *, out_dims):
    """(Linear -> ReLU) x5 -> Linear on one batch tile.

    x_ref  : (TILE_B, input_size)  f32   (cast to bf16 in VMEM)
    w*_ref : (in, out)             bf16  (resident across batch tiles)
    b_ref  : (1, sum(out_dims))    f32   (all six biases, 128-aligned offsets)
    out_ref: (TILE_B, output_size) f32
    """
    offs = []
    o = 0
    for d in out_dims:
        offs.append(o)
        o += d

    def layer(h, w_ref, idx, relu):
        # MXU matmul: bf16 operands, f32 accumulation.
        y = jnp.dot(h, w_ref[...], preferred_element_type=jnp.float32)
        # Static bias slice (layer offsets are 128-aligned); f32 broadcast add.
        y = y + b_ref[:, offs[idx]:offs[idx] + out_dims[idx]]
        if relu:
            # Bias-add + ReLU on the VPU in f32, then narrow for the next MXU pass.
            return jnp.maximum(y, 0.0).astype(jnp.bfloat16)
        return y

    h = x_ref[...].astype(jnp.bfloat16)
    h = layer(h, w1_ref, 0, True)
    h = layer(h, w2_ref, 1, True)
    h = layer(h, w3_ref, 2, True)
    h = layer(h, w4_ref, 3, True)
    h = layer(h, w5_ref, 4, True)
    out_ref[...] = layer(h, w6_ref, 5, False).astype(out_ref.dtype)


def init_params(key, input_size, output_size):
    """nn.Linear-style init; weights stored transposed (in, out) so y = x @ W + b."""
    dims = [input_size, *_HIDDEN, output_size]
    params = []
    for i in range(6):
        fan_in, fan_out = dims[i], dims[i + 1]
        key, kw, kb = jax.random.split(key, 3)
        bound = 1.0 / jnp.sqrt(fan_in)
        w = jax.random.uniform(kw, (fan_in, fan_out), jnp.float32,
                               minval=-bound, maxval=bound)
        b = jax.random.uniform(kb, (1, fan_out), jnp.float32,
                               minval=-bound, maxval=bound)
        params.extend([w, b])
    return tuple(params)


def prepare_params(params):
    """One-time prep: weights -> bf16 (unpadded, (in, out) layout), biases ->
    a single (1, sum(out_dims)) f32 buffer.  Call once at init and reuse."""
    ws = tuple(params[2 * i].astype(jnp.bfloat16) for i in range(6))
    b_all = jnp.concatenate(
        [params[2 * i + 1].reshape(1, -1).astype(jnp.float32) for i in range(6)],
        axis=1)
    return ws, b_all


@functools.partial(jax.jit, static_argnames=("tile_b",))
def _forward_impl(x, ws, b_all, *, tile_b):
    batch, input_size = x.shape
    output_size = ws[-1].shape[1]
    out_dims = tuple(int(w.shape[1]) for w in ws)
    grid = (pl.cdiv(batch, tile_b),)

    const_map = lambda i: (0, 0)
    tile_map = lambda i: (i, 0)

    in_specs = [pl.BlockSpec((tile_b, input_size), tile_map)]
    in_specs += [pl.BlockSpec(w.shape, const_map) for w in ws]
    in_specs += [pl.BlockSpec(b_all.shape, const_map)]

    flops = 2 * batch * sum(int(w.shape[0]) * int(w.shape[1]) for w in ws)
    bytes_accessed = (int(x.size) * x.dtype.itemsize
                      + batch * output_size * 4
                      + sum(int(w.size) * 2 for w in ws)
                      + int(b_all.size) * 4)

    return pl.pallas_call(
        functools.partial(_mlp_kernel, out_dims=out_dims),
        out_shape=jax.ShapeDtypeStruct((batch, output_size), jnp.float32),
        grid=grid,
        in_specs=in_specs,
        out_specs=pl.BlockSpec((tile_b, output_size), tile_map),
        compiler_params=pltpu.CompilerParams(
            dimension_semantics=("parallel",)),
        cost_estimate=pl.CostEstimate(
            flops=int(flops), transcendentals=0,
            bytes_accessed=int(bytes_accessed)),
    )(x, *ws, b_all)


def make_wavefunction_predictor(params):
    """Build the forward function.  Weight prep runs exactly once here; every
    subsequent call is a single jitted pallas_call (no eager per-call ops)."""
    ws, b_all = prepare_params(params)

    def forward(x, *, tile_b=None):
        x = jnp.asarray(x, jnp.float32)
        tb = int(tile_b) if tile_b is not None else _choose_tile_b(x.shape[0])
        return _forward_impl(x, ws, b_all, tile_b=tb)

    return forward


def reference_forward_f32(x, params):
    """Pure f32 reference (PyTorch WavefunctionPredictor numerics)."""
    h = jnp.asarray(x, jnp.float32)
    for i in range(6):
        h = h @ params[2 * i] + params[2 * i + 1]
        if i < 5:
            h = jnp.maximum(h, 0.0)
    return h


def reference_forward_bf16(x, params):
    """Reference with the kernel's exact mixed precision (bf16 operands, f32 accum)."""
    ws, b_all = prepare_params(params)
    h = jnp.asarray(x, jnp.float32).astype(jnp.bfloat16)
    off = 0
    y = None
    for i, w in enumerate(ws):
        n = w.shape[1]
        y = jnp.dot(h, w, preferred_element_type=jnp.float32) + b_all[:, off:off + n]
        off += n
        if i < 5:
            h = jnp.maximum(y, 0.0).astype(jnp.bfloat16)
    return y


if __name__ == "__main__":
    key = jax.random.PRNGKey(0)
    input_size, output_size = 32, 32
    k_x, k_p = jax.random.split(key)
    params = init_params(k_p, input_size, output_size)

    forward = make_wavefunction_predictor(params)   # one-time weight prep

    # Single-step grid (whole batch fits one tile).
    x_small = jax.random.normal(k_x, (8, input_size), jnp.float32)
    out_small = jax.block_until_ready(forward(x_small))
    assert out_small.shape == (8, output_size)

    # Multi-step grid (weights stay resident across batch tiles; 2 steps).
    x_multi = jax.random.normal(jax.random.fold_in(k_x, 1), (96, input_size),
                                jnp.float32)
    out_multi = jax.block_until_ready(forward(x_multi))

    # Ragged batch: pl.cdiv grid, tail rows of the last block dropped on writeback.
    x_ragged = jax.random.normal(jax.random.fold_in(k_x, 2), (100, input_size),
                                 jnp.float32)
    out_ragged = jax.block_until_ready(forward(x_ragged))

    for x, out in ((x_small, out_small), (x_multi, out_multi),
                   (x_ragged, out_ragged)):
        ref_mixed = reference_forward_bf16(x, params)
        ref_f32 = reference_forward_f32(x, params)
        assert out.shape == ref_f32.shape
        # Matches the kernel's own mixed-precision math tightly ...
        assert jnp.allclose(out, ref_mixed, atol=1e-2, rtol=1e-2), \
            "mismatch vs mixed-precision reference"
        # ... and the pure-f32 (PyTorch) numerics at bf16-level accuracy.
        assert jnp.allclose(out, ref_f32, atol=1e-1, rtol=1e-1), \
            "mismatch vs f32 reference"

    print("KERNEL_OK")
</pallas_src>

<mosaic_0001>
module attributes {stable_mosaic.version = 11 : i64} {
  func.func @_mlp_kernel(%arg0: i32, %arg1: memref<8x32xf32, #tpu.memory_space<vmem>>, %arg2: memref<32x128xbf16, #tpu.memory_space<vmem>>, %arg3: memref<128x256xbf16, #tpu.memory_space<vmem>>, %arg4: memref<256x512xbf16, #tpu.memory_space<vmem>>, %arg5: memref<512x256xbf16, #tpu.memory_space<vmem>>, %arg6: memref<256x128xbf16, #tpu.memory_space<vmem>>, %arg7: memref<128x32xbf16, #tpu.memory_space<vmem>>, %arg8: memref<1x1312xf32, #tpu.memory_space<vmem>>, %arg9: memref<8x32xf32, #tpu.memory_space<vmem>>) attributes {dimension_semantics = [#tpu.dimension_semantics<parallel>], iteration_bounds = array<i64: 1>, scalar_prefetch = 0 : i64, scratch_operands = 0 : i64, tpu.core_type = #tpu.core_type<tc>, window_params = [{transform_indices = @transform_0, window_bounds = array<i64: 8, 32>}, {pipeline_mode = #tpu.pipeline_mode<synchronous>, transform_indices = @transform_1, window_bounds = array<i64: 32, 128>}, {pipeline_mode = #tpu.pipeline_mode<synchronous>, transform_indices = @transform_2, window_bounds = array<i64: 128, 256>}, {pipeline_mode = #tpu.pipeline_mode<synchronous>, transform_indices = @transform_3, window_bounds = array<i64: 256, 512>}, {pipeline_mode = #tpu.pipeline_mode<synchronous>, transform_indices = @transform_4, window_bounds = array<i64: 512, 256>}, {pipeline_mode = #tpu.pipeline_mode<synchronous>, transform_indices = @transform_5, window_bounds = array<i64: 256, 128>}, {pipeline_mode = #tpu.pipeline_mode<synchronous>, transform_indices = @transform_6, window_bounds = array<i64: 128, 32>}, {pipeline_mode = #tpu.pipeline_mode<synchronous>, transform_indices = @transform_7, window_bounds = array<i64: 1, 1312>}, {transform_indices = @transform_8, window_bounds = array<i64: 8, 32>}]} {
    %c0 = arith.constant 0 : index
    %c0_0 = arith.constant 0 : index
    %0 = vector.load %arg1[%c0, %c0_0] : memref<8x32xf32, #tpu.memory_space<vmem>>, vector<8x32xf32>
    %1 = arith.truncf %0 : vector<8x32xf32> to vector<8x32xbf16>
    %c0_1 = arith.constant 0 : index
    %c0_2 = arith.constant 0 : index
    %2 = vector.load %arg2[%c0_1, %c0_2] : memref<32x128xbf16, #tpu.memory_space<vmem>>, vector<32x128xbf16>
    %cst = arith.constant dense<0.000000e+00> : vector<8x128xf32>
    %3 = tpu.matmul %1, %2, %cst {dimension_numbers = #tpu.dot_dimension_numbers<[1], [0], [0], [1], [0, 0, 1, 1], [], []>} : vector<8x32xbf16>, vector<32x128xbf16>, vector<8x128xf32> -> vector<8x128xf32>
    %c0_3 = arith.constant 0 : index
    %c0_4 = arith.constant 0 : index
    %4 = vector.load %arg8[%c0_3, %c0_4] : memref<1x1312xf32, #tpu.memory_space<vmem>>, vector<1x128xf32>
    %5 = vector.broadcast %4 : vector<1x128xf32> to vector<8x128xf32>
    %6 = arith.addf %3, %5 : vector<8x128xf32>
    %cst_5 = arith.constant 0.000000e+00 : f32
    %7 = vector.broadcast %cst_5 : f32 to vector<8x128xf32>
    %8 = arith.maximumf %6, %7 : vector<8x128xf32>
    %9 = arith.truncf %8 : vector<8x128xf32> to vector<8x128xbf16>
    %c0_6 = arith.constant 0 : index
    %c0_7 = arith.constant 0 : index
    %10 = vector.load %arg3[%c0_6, %c0_7] : memref<128x256xbf16, #tpu.memory_space<vmem>>, vector<128x256xbf16>
    %cst_8 = arith.constant dense<0.000000e+00> : vector<8x256xf32>
    %11 = tpu.matmul %9, %10, %cst_8 {dimension_numbers = #tpu.dot_dimension_numbers<[1], [0], [0], [1], [0, 0, 1, 1], [], []>} : vector<8x128xbf16>, vector<128x256xbf16>, vector<8x256xf32> -> vector<8x256xf32>
    %c0_9 = arith.constant 0 : index
    %c128 = arith.constant 128 : index
    %12 = vector.load %arg8[%c0_9, %c128] : memref<1x1312xf32, #tpu.memory_space<vmem>>, vector<1x256xf32>
    %13 = vector.broadcast %12 : vector<1x256xf32> to vector<8x256xf32>
    %14 = arith.addf %11, %13 : vector<8x256xf32>
    %cst_10 = arith.constant 0.000000e+00 : f32
    %15 = vector.broadcast %cst_10 : f32 to vector<8x256xf32>
    %16 = arith.maximumf %14, %15 : vector<8x256xf32>
    %17 = arith.truncf %16 : vector<8x256xf32> to vector<8x256xbf16>
    %c0_11 = arith.constant 0 : index
    %c0_12 = arith.constant 0 : index
    %18 = vector.load %arg4[%c0_11, %c0_12] : memref<256x512xbf16, #tpu.memory_space<vmem>>, vector<256x512xbf16>
    %cst_13 = arith.constant dense<0.000000e+00> : vector<8x512xf32>
    %19 = tpu.matmul %17, %18, %cst_13 {dimension_numbers = #tpu.dot_dimension_numbers<[1], [0], [0], [1], [0, 0, 1, 1], [], []>} : vector<8x256xbf16>, vector<256x512xbf16>, vector<8x512xf32> -> vector<8x512xf32>
    %c0_14 = arith.constant 0 : index
    %c384 = arith.constant 384 : index
    %20 = vector.load %arg8[%c0_14, %c384] : memref<1x1312xf32, #tpu.memory_space<vmem>>, vector<1x512xf32>
    %21 = vector.broadcast %20 : vector<1x512xf32> to vector<8x512xf32>
    %22 = arith.addf %19, %21 : vector<8x512xf32>
    %cst_15 = arith.constant 0.000000e+00 : f32
    %23 = vector.broadcast %cst_15 : f32 to vector<8x512xf32>
    %24 = arith.maximumf %22, %23 : vector<8x512xf32>
    %25 = arith.truncf %24 : vector<8x512xf32> to vector<8x512xbf16>
    %c0_16 = arith.constant 0 : index
    %c0_17 = arith.constant 0 : index
    %26 = vector.load %arg5[%c0_16, %c0_17] : memref<512x256xbf16, #tpu.memory_space<vmem>>, vector<512x256xbf16>
    %cst_18 = arith.constant dense<0.000000e+00> : vector<8x256xf32>
    %27 = tpu.matmul %25, %26, %cst_18 {dimension_numbers = #tpu.dot_dimension_numbers<[1], [0], [0], [1], [0, 0, 1, 1], [], []>} : vector<8x512xbf16>, vector<512x256xbf16>, vector<8x256xf32> -> vector<8x256xf32>
    %c0_19 = arith.constant 0 : index
    %c896 = arith.constant 896 : index
    %28 = vector.load %arg8[%c0_19, %c896] : memref<1x1312xf32, #tpu.memory_space<vmem>>, vector<1x256xf32>
    %29 = vector.broadcast %28 : vector<1x256xf32> to vector<8x256xf32>
    %30 = arith.addf %27, %29 : vector<8x256xf32>
    %cst_20 = arith.constant 0.000000e+00 : f32
    %31 = vector.broadcast %cst_20 : f32 to vector<8x256xf32>
    %32 = arith.maximumf %30, %31 : vector<8x256xf32>
    %33 = arith.truncf %32 : vector<8x256xf32> to vector<8x256xbf16>
    %c0_21 = arith.constant 0 : index
    %c0_22 = arith.constant 0 : index
    %34 = vector.load %arg6[%c0_21, %c0_22] : memref<256x128xbf16, #tpu.memory_space<vmem>>, vector<256x128xbf16>
    %cst_23 = arith.constant dense<0.000000e+00> : vector<8x128xf32>
    %35 = tpu.matmul %33, %34, %cst_23 {dimension_numbers = #tpu.dot_dimension_numbers<[1], [0], [0], [1], [0, 0, 1, 1], [], []>} : vector<8x256xbf16>, vector<256x128xbf16>, vector<8x128xf32> -> vector<8x128xf32>
    %c0_24 = arith.constant 0 : index
    %c1152 = arith.constant 1152 : index
    %36 = vector.load %arg8[%c0_24, %c1152] : memref<1x1312xf32, #tpu.memory_space<vmem>>, vector<1x128xf32>
    %37 = vector.broadcast %36 : vector<1x128xf32> to vector<8x128xf32>
    %38 = arith.addf %35, %37 : vector<8x128xf32>
    %cst_25 = arith.constant 0.000000e+00 : f32
    %39 = vector.broadcast %cst_25 : f32 to vector<8x128xf32>
    %40 = arith.maximumf %38, %39 : vector<8x128xf32>
    %41 = arith.truncf %40 : vector<8x128xf32> to vector<8x128xbf16>
    %c0_26 = arith.constant 0 : index
    %c0_27 = arith.constant 0 : index
    %42 = vector.load %arg7[%c0_26, %c0_27] : memref<128x32xbf16, #tpu.memory_space<vmem>>, vector<128x32xbf16>
    %cst_28 = arith.constant dense<0.000000e+00> : vector<8x32xf32>
    %43 = tpu.matmul %41, %42, %cst_28 {dimension_numbers = #tpu.dot_dimension_numbers<[1], [0], [0], [1], [0, 0, 1, 1], [], []>} : vector<8x128xbf16>, vector<128x32xbf16>, vector<8x32xf32> -> vector<8x32xf32>
    %c0_29 = arith.constant 0 : index
    %c1280 = arith.constant 1280 : index
    %44 = vector.load %arg8[%c0_29, %c1280] : memref<1x1312xf32, #tpu.memory_space<vmem>>, vector<1x32xf32>
    %45 = vector.broadcast %44 : vector<1x32xf32> to vector<8x32xf32>
    %46 = arith.addf %43, %45 : vector<8x32xf32>
    %c0_30 = arith.constant 0 : index
    %c0_31 = arith.constant 0 : index
    %47 = vector.load %arg9[%c0_30, %c0_31] : memref<8x32xf32, #tpu.memory_space<vmem>>, vector<8x32xf32>
    tpu.vector_store %arg9[%c0_30, %c0_31], %46 {strides = array<i32>} : memref<8x32xf32, #tpu.memory_space<vmem>>, vector<8x32xf32>,
    return
  }
  func.func @transform_0(%arg0: i32) -> (i32, i32) {
    %c0_i32 = arith.constant 0 : i32
    %c0_i32_0 = arith.constant 0 : i32
    return %arg0, %c0_i32 : i32, i32
  }
  func.func @transform_1(%arg0: i32) -> (i32, i32) {
    %c0_i32 = arith.constant 0 : i32
    %c0_i32_0 = arith.constant 0 : i32
    %c0_i32_1 = arith.constant 0 : i32
    return %c0_i32, %c0_i32_0 : i32, i32
  }
  func.func @transform_2(%arg0: i32) -> (i32, i32) {
    %c0_i32 = arith.constant 0 : i32
    %c0_i32_0 = arith.constant 0 : i32
    %c0_i32_1 = arith.constant 0 : i32
    return %c0_i32, %c0_i32_0 : i32, i32
  }
  func.func @transform_3(%arg0: i32) -> (i32, i32) {
    %c0_i32 = arith.constant 0 : i32
    %c0_i32_0 = arith.constant 0 : i32
    %c0_i32_1 = arith.constant 0 : i32
    return %c0_i32, %c0_i32_0 : i32, i32
  }
  func.func @transform_4(%arg0: i32) -> (i32, i32) {
    %c0_i32 = arith.constant 0 : i32
    %c0_i32_0 = arith.constant 0 : i32
    %c0_i32_1 = arith.constant 0 : i32
    return %c0_i32, %c0_i32_0 : i32, i32
  }
  func.func @transform_5(%arg0: i32) -> (i32, i32) {
    %c0_i32 = arith.constant 0 : i32
    %c0_i32_0 = arith.constant 0 : i32
    %c0_i32_1 = arith.constant 0 : i32
    return %c0_i32, %c0_i32_0 : i32, i32
  }
  func.func @transform_6(%arg0: i32) -> (i32, i32) {
    %c0_i32 = arith.constant 0 : i32
    %c0_i32_0 = arith.constant 0 : i32
    %c0_i32_1 = arith.constant 0 : i32
    return %c0_i32, %c0_i32_0 : i32, i32
  }
  func.func @transform_7(%arg0: i32) -> (i32, i32) {
    %c0_i32 = arith.constant 0 : i32
    %c0_i32_0 = arith.constant 0 : i32
    %c0_i32_1 = arith.constant 0 : i32
    return %c0_i32, %c0_i32_0 : i32, i32
  }
  func.func @transform_8(%arg0: i32) -> (i32, i32) {
    %c0_i32 = arith.constant 0 : i32
    %c0_i32_0 = arith.constant 0 : i32
    return %arg0, %c0_i32 : i32, i32
  }
}

</mosaic_0001>

<llo_original>
// kernel: _forward_impl.1
$region0: #{_forward_impl.1}
  #allocation0 [shape = 'u32[]', space=smem, size = 0x4, offset = 0x4, fixed_abs, tag = 'smem constant byte address 0x4 - core index']
  #allocation1 [shape = 'u32[144,128]{1,0:T(1,128)}', space=vmem, size = 0x12000, scoped, tag = 'internal scratch']
  %s0 = inlined_call_operand.vmem [shape: f32[8,32], index: 0, kind: input, shape index: {}]
  %s1 = inlined_call_operand.vmem [shape: bf16[32,128], index: 1, kind: input, shape index: {}]
  %s2 = inlined_call_operand.hbm [shape: bf16[128,256], index: 2, kind: input, shape index: {}]
  %s3 = inlined_call_operand.hbm [shape: bf16[256,512], index: 3, kind: input, shape index: {}]
  %s4 = inlined_call_operand.hbm [shape: bf16[512,256], index: 4, kind: input, shape index: {}]
  %s5 = inlined_call_operand.hbm [shape: bf16[256,128], index: 5, kind: input, shape index: {}]
  %s6 = inlined_call_operand.vmem [shape: bf16[128,32], index: 6, kind: input, shape index: {}]
  %s7 = inlined_call_operand.vmem [shape: f32[1,1312], index: 7, kind: input, shape index: {}]
  %s8 = inlined_call_operand.hbm [shape: f32[8,32], index: 8, kind: output, shape index: {}]
  %s9 = sld [smem:[#allocation0]]
  $region58: #{_forward_impl.1} parent=0
    _
  %s11 = ssub.s32 1, %s9
  %s12 = scalar_select 0, %s11, %s9
  $region1: #{_forward_impl.1} parent=0
    #allocation2 [shape = 'u8[65536]{0}', space=vmem, size = 0x10000, scoped, tag = 'input window, operand 2, single buffered']
    #allocation3 [shape = 's32[1]{0}', space=sflag, size = 0x4, scoped, tag = 'scoped memory for _forward_impl.1']
    #allocation4 [shape = 's32[1]{0}', space=sflag, size = 0x4, scoped, tag = 'scoped memory for _forward_impl.1']
    #allocation5 [shape = 'u8[262144]{0}', space=vmem, size = 0x40000, scoped, tag = 'input window, operand 3, single buffered']
    #allocation6 [shape = 's32[1]{0}', space=sflag, size = 0x4, scoped, tag = 'scoped memory for _forward_impl.1']
    #allocation7 [shape = 'u8[262144]{0}', space=vmem, size = 0x40000, scoped, tag = 'input window, operand 4, single buffered']
    #allocation8 [shape = 'u8[65536]{0}', space=vmem, size = 0x10000, scoped, tag = 'input window, operand 5, single buffered']
    #allocation9 [shape = 's32[1]{0}', space=sflag, size = 0x4, scoped, tag = 'scoped memory for _forward_impl.1']
    #allocation10 [shape = 'u8[4096]{0}', space=vmem, size = 0x1000, scoped, tag = 'output window, operand 0, single buffered']
    %13 = vsyncpa [#allocation3], 0
    %14 = vsyncpa [#allocation6], 0
    %15 = vsyncpa [#allocation9], 0
    %16 = vsyncpa [#allocation4], 0
    // Predicated region
    $region2: #{_forward_impl.1} parent=1 // pred_check
      _
    $region3: #{_forward_impl.1} parent=1 // pred_check_branch
      %18 = sbr.rel (0) target = $region5
    $region4: #{_forward_impl.1} parent=1 // pred_region
      _
    $region5: #{_forward_impl.1} parent=1 // pred_fallthru
      _
    // Predicated region
    $region6: #{_forward_impl.1} parent=1 // pred_check
      _
    $region7: #{_forward_impl.1} parent=1 // pred_check_branch
      %20 = sbr.rel (0) target = $region9
    $region8: #{_forward_impl.1} parent=1 // pred_region
      _
    $region9: #{_forward_impl.1} parent=1 // pred_fallthru
      _
    // Predicated region
    $region10: #{_forward_impl.1} parent=1 // pred_check
      _
    $region11: #{_forward_impl.1} parent=1 // pred_check_branch
      %22 = sbr.rel (0) target = $region13
    $region12: #{_forward_impl.1} parent=1 // pred_region
      %s24 = ssub.s32 2048, 2048
      %25 = vsyncadd [#allocation3], %s24
      %s26 = sshll.u32 [#allocation2], 4
      %s27 = int_to_ptr.vmem [resolvable:$true] %s26
      %32 = dma.hbm_to_vmem [thread:$0]  %s2, 2048, %s27, [#allocation3], 128, 128, 8
    $region13: #{_forward_impl.1} parent=1 // pred_fallthru
      _
    // Predicated region
    $region14: #{_forward_impl.1} parent=1 // pred_check
      _
    $region15: #{_forward_impl.1} parent=1 // pred_check_branch
      %34 = sbr.rel (0) target = $region17
    $region16: #{_forward_impl.1} parent=1 // pred_region
      %s36 = ssub.s32 8192, 8192
      %37 = vsyncadd [#allocation6], %s36
      %s38 = sshll.u32 [#allocation5], 4
      %s39 = int_to_ptr.vmem [resolvable:$true] %s38
      %44 = dma.hbm_to_vmem [thread:$0]  %s3, 8192, %s39, [#allocation6], 256, 256, 16
    $region17: #{_forward_impl.1} parent=1 // pred_fallthru
      _
    // Predicated region
    $region18: #{_forward_impl.1} parent=1 // pred_check
      _
    $region19: #{_forward_impl.1} parent=1 // pred_check_branch
      %46 = sbr.rel (0) target = $region21
    $region20: #{_forward_impl.1} parent=1 // pred_region
      %s48 = ssub.s32 8192, 8192
      %49 = vsyncadd [#allocation6], %s48
      %s50 = sshll.u32 [#allocation7], 4
      %s51 = int_to_ptr.vmem [resolvable:$true] %s50
      %56 = dma.hbm_to_vmem [thread:$0]  %s4, 8192, %s51, [#allocation6], 128, 128, 8
    $region21: #{_forward_impl.1} parent=1 // pred_fallthru
      _
    // Predicated region
    $region22: #{_forward_impl.1} parent=1 // pred_check
      _
    $region23: #{_forward_impl.1} parent=1 // pred_check_branch
      %58 = sbr.rel (0) target = $region25
    $region24: #{_forward_impl.1} parent=1 // pred_region
      %s60 = ssub.s32 2048, 2048
      %61 = vsyncadd [#allocation9], %s60
      %s62 = sshll.u32 [#allocation8], 4
      %s63 = int_to_ptr.vmem [resolvable:$true] %s62
      %68 = dma.hbm_to_vmem [thread:$0]  %s5, 2048, %s63, [#allocation9], 64, 64, 4
    $region25: #{_forward_impl.1} parent=1 // pred_fallthru
      _
    // Predicated region
    $region26: #{_forward_impl.1} parent=1 // pred_check
      _
    $region27: #{_forward_impl.1} parent=1 // pred_check_branch
      %70 = sbr.rel (0) target = $region29
    $region28: #{_forward_impl.1} parent=1 // pred_region
      _
    $region29: #{_forward_impl.1} parent=1 // pred_fallthru
      _
    // Predicated region
    $region30: #{_forward_impl.1} parent=1 // pred_check
      _
    $region31: #{_forward_impl.1} parent=1 // pred_check_branch
      %72 = sbr.rel (0) target = $region33
    $region32: #{_forward_impl.1} parent=1 // pred_region
      _
    $region33: #{_forward_impl.1} parent=1 // pred_fallthru
      _
    // Predicated region
    $region34: #{_forward_impl.1} parent=1 // pred_check
      _
    $region35: #{_forward_impl.1} parent=1 // pred_check_branch
      %74 = sbr.rel (0) target = $region37
    $region36: #{_forward_impl.1} parent=1 // pred_region
      %75 = dma.done [#allocation3], 2048
    $region37: #{_forward_impl.1} parent=1 // pred_fallthru
      _
    // Predicated region
    $region38: #{_forward_impl.1} parent=1 // pred_check
      _
    $region39: #{_forward_impl.1} parent=1 // pred_check_branch
      %77 = sbr.rel (0) target = $region41
    $region40: #{_forward_impl.1} parent=1 // pred_region
      %78 = dma.done [#allocation6], 8192
    $region41: #{_forward_impl.1} parent=1 // pred_fallthru
      _
    // Predicated region
    $region42: #{_forward_impl.1} parent=1 // pred_check
      _
    $region43: #{_forward_impl.1} parent=1 // pred_check_branch
      %80 = sbr.rel (0) target = $region45
    $region44: #{_forward_impl.1} parent=1 // pred_region
      %81 = dma.done [#allocation6], 8192
    $region45: #{_forward_impl.1} parent=1 // pred_fallthru
      _
    // Predicated region
    $region46: #{_forward_impl.1} parent=1 // pred_check
      _
    $region47: #{_forward_impl.1} parent=1 // pred_check_branch
      %83 = sbr.rel (0) target = $region49
    $region48: #{_forward_impl.1} parent=1 // pred_region
      %84 = dma.done [#allocation9], 2048
    $region49: #{_forward_impl.1} parent=1 // pred_fallthru
      _
    %v86 = vld [vmem:[%s0] sm:$0xff]
    %v87 = vpack.c.bf16 %v86, %v86
    %v88 = vld [vmem:[%s1] sm:$0xf]
    %v89 = vld [vmem:[%s1 + $0x4] sm:$0xf]
    %v90 = vld [vmem:[%s1 + $0x8] sm:$0xf]
    %v91 = vld [vmem:[%s1 + $0xc] sm:$0xf]
    %v92 = vld [vmem:[%s7] sm:$0x1]
    %v94 = vlaneseq
    %v95 = vshrl.u32 %v94, 7
    %v96 = vsub.s32 0, %v95
    %v97 = vrot.slane %v92, %v96
    %v103 = vunpack.c.l.b16 %v88
    %v104 = vunpack.c.l.b16 %v89
    %v105 = vunpack.c.l.b16 %v90
    %v106 = vunpack.c.l.b16 %v91
    %v107 = vpack.c.b16 %v104, %v103
    %v108 = vpack.c.b16 %v106, %v105
    %vm111 = vcmask 261120
    %v113 = vsel %vm111, %v87, 0
    %115 = vmatprep.subr.bf16.mxu0 0
    %116 = vmatpush1.bf16.msra.mxu0 %v107
    %117 = vmatprep.subr.bf16.mxu0 0
    %118 = vmatpush1.bf16.msra.mxu0 %v108
    %119 = vmatprep.subr.bf16.mxu0 0
    %120 = vmatpush1.bf16.msra.mxu0 0
    %121 = vmatprep.subr.bf16.mxu0 0
    %122 = vmatpush1.bf16.msra.mxu0 0
    %123 = vmatprep.subr.bf16.mxu0 0
    %124 = vmatpush1.bf16.msra.mxu0 0
    %125 = vmatprep.subr.bf16.mxu0 0
    %126 = vmatpush1.bf16.msra.mxu0 0
    %127 = vmatprep.subr.bf16.mxu0 0
    %128 = vmatpush1.bf16.msra.mxu0 0
    %129 = vmatprep.subr.bf16.mxu0 0
    %130 = vmatpush1.bf16.msra.mxu0 0
    %131 = vmatprep.subr.bf16.mxu0 0
    %132 = vmatpush1.bf16.msra.mxu0 0
    %133 = vmatprep.subr.bf16.mxu0 0
    %134 = vmatpush1.bf16.msra.mxu0 0
    %135 = vmatprep.subr.bf16.mxu0 0
    %136 = vmatpush1.bf16.msra.mxu0 0
    %137 = vmatprep.subr.bf16.mxu0 0
    %138 = vmatpush1.bf16.msra.mxu0 0
    %139 = vmatprep.subr.bf16.mxu0 0
    %140 = vmatpush1.bf16.msra.mxu0 0
    %141 = vmatprep.subr.bf16.mxu0 0
    %142 = vmatpush1.bf16.msra.mxu0 0
    %143 = vmatprep.subr.bf16.mxu0 0
    %144 = vmatpush1.bf16.msra.mxu0 0
    %145 = vmatprep.subr.bf16.mxu0 0
    %146 = vmatpush1.bf16.msra.mxu0 0
    %147 = vmatprep.mubr.bf16.mxu0 0
    %148 = vmatmul.mubr.bf16.gmra.mrb[0].mxu0 %v113
    %v149 = vpop.f32.mrb[0].mxu0
    %v150 = vadd.f32 %v97, %v149
    %v151 = vpop.f32.mrb[0].mxu0
    %v152 = vpop.f32.mrb[0].mxu0
    %v153 = vpop.f32.mrb[0].mxu0
    %154 = vdwg.mxu0
    %v155 = vmax.f32 %v150, 0.0
    %v156 = vpack.c.bf16 %v155, %v155
    %v157 = vld [vmem:[#allocation2] sm:$0xff]
    %v158 = vld [vmem:[#allocation2 + $0x8] sm:$0xff]
    %v159 = vld [vmem:[#allocation2 + $0x10] sm:$0xff]
    %v160 = vld [vmem:[#allocation2 + $0x18] sm:$0xff]
    %v161 = vld [vmem:[#allocation2 + $0x20] sm:$0xff]
    %v162 = vld [vmem:[#allocation2 + $0x28] sm:$0xff]
    %v163 = vld [vmem:[#allocation2 + $0x30] sm:$0xff]
    %v164 = vld [vmem:[#allocation2 + $0x38] sm:$0xff]
    %v165 = vld [vmem:[#allocation2 + $0x40] sm:$0xff]
    %v166 = vld [vmem:[#allocation2 + $0x48] sm:$0xff]
    %v167 = vld [vmem:[#allocation2 + $0x50] sm:$0xff]
    %v168 = vld [vmem:[#allocation2 + $0x58] sm:$0xff]
    %v169 = vld [vmem:[#allocation2 + $0x60] sm:$0xff]
    %v170 = vld [vmem:[#allocation2 + $0x68] sm:$0xff]
    %v171 = vld [vmem:[#allocation2 + $0x70] sm:$0xff]
    %v172 = vld [vmem:[#allocation2 + $0x78] sm:$0xff]
    %v173 = vld [vmem:[%s7 + $0x1] sm:$0x3]
    %v175 = vlaneseq
    %v176 = vshrl.u32 %v175, 7
    %v177 = vsub.s32 0, %v176
    %v178 = vrot.slane %v173, %v177
    %v179 = vlaneseq
    %v180 = vshrl.u32 %v179, 7
    %v181 = vsub.s32 1, %v180
    %v182 = vrot.slane %v173, %v181
    %v201 = vunpack.c.l.b16 %v157
    %v202 = vunpack.c.h.b16 %v157
    %v203 = vunpack.c.l.b16 %v158
    %v204 = vunpack.c.h.b16 %v158
    %v205 = vunpack.c.l.b16 %v159
    %v206 = vunpack.c.h.b16 %v159
    %v207 = vunpack.c.l.b16 %v160
    %v208 = vunpack.c.h.b16 %v160
    %v209 = vunpack.c.l.b16 %v161
    %v210 = vunpack.c.h.b16 %v161
    %v211 = vunpack.c.l.b16 %v162
    %v212 = vunpack.c.h.b16 %v162
    %v213 = vunpack.c.l.b16 %v163
    %v214 = vunpack.c.h.b16 %v163
    %v215 = vunpack.c.l.b16 %v164
    %v216 = vunpack.c.h.b16 %v164
    %v217 = vunpack.c.l.b16 %v165
    %v218 = vunpack.c.h.b16 %v165
    %v219 = vunpack.c.l.b16 %v166
    %v220 = vunpack.c.h.b16 %v166
    %v221 = vunpack.c.l.b16 %v167
    %v222 = vunpack.c.h.b16 %v167
    %v223 = vunpack.c.l.b16 %v168
    %v224 = vunpack.c.h.b16 %v168
    %v225 = vunpack.c.l.b16 %v169
    %v226 = vunpack.c.h.b16 %v169
    %v227 = vunpack.c.l.b16 %v170
    %v228 = vunpack.c.h.b16 %v170
    %v229 = vunpack.c.l.b16 %v171
    %v230 = vunpack.c.h.b16 %v171
    %v231 = vunpack.c.l.b16 %v172
    %v232 = vunpack.c.h.b16 %v172
    %v233 = vpack.c.b16 %v203, %v201
    %v234 = vpack.c.b16 %v204, %v202
    %v235 = vpack.c.b16 %v207, %v205
    %v236 = vpack.c.b16 %v208, %v206
    %v237 = vpack.c.b16 %v211, %v209
    %v238 = vpack.c.b16 %v212, %v210
    %v239 = vpack.c.b16 %v215, %v213
    %v240 = vpack.c.b16 %v216, %v214
    %v241 = vpack.c.b16 %v219, %v217
    %v242 = vpack.c.b16 %v220, %v218
    %v243 = vpack.c.b16 %v223, %v221
    %v244 = vpack.c.b16 %v224, %v222
    %v245 = vpack.c.b16 %v227, %v225
    %v246 = vpack.c.b16 %v228, %v226
    %v247 = vpack.c.b16 %v231, %v229
    %v248 = vpack.c.b16 %v232, %v230
    %265 = vmatprep.subr.bf16.mxu0 %v234
    %266 = vmatpush1.bf16.msra.mxu0 %v233
    %267 = vmatprep.subr.bf16.mxu0 %v236
    %268 = vmatpush1.bf16.msra.mxu0 %v235
    %269 = vmatprep.subr.bf16.mxu0 %v238
    %270 = vmatpush1.bf16.msra.mxu0 %v237
    %271 = vmatprep.subr.bf16.mxu0 %v240
    %272 = vmatpush1.bf16.msra.mxu0 %v239
    %273 = vmatprep.subr.bf16.mxu0 %v242
    %274 = vmatpush1.bf16.msra.mxu0 %v241
    %275 = vmatprep.subr.bf16.mxu0 %v244
    %276 = vmatpush1.bf16.msra.mxu0 %v243
    %277 = vmatprep.subr.bf16.mxu0 %v246
    %278 = vmatpush1.bf16.msra.mxu0 %v245
    %279 = vmatprep.subr.bf16.mxu0 %v248
    %280 = vmatpush1.bf16.msra.mxu0 %v247
    %281 = vmatprep.subr.bf16.mxu0 0
    %282 = vmatpush1.bf16.msra.mxu0 0
    %283 = vmatprep.subr.bf16.mxu0 0
    %284 = vmatpush1.bf16.msra.mxu0 0
    %285 = vmatprep.subr.bf16.mxu0 0
    %286 = vmatpush1.bf16.msra.mxu0 0
    %287 = vmatprep.subr.bf16.mxu0 0
    %288 = vmatpush1.bf16.msra.mxu0 0
    %289 = vmatprep.subr.bf16.mxu0 0
    %290 = vmatpush1.bf16.msra.mxu0 0
    %291 = vmatprep.subr.bf16.mxu0 0
    %292 = vmatpush1.bf16.msra.mxu0 0
    %293 = vmatprep.subr.bf16.mxu0 0
    %294 = vmatpush1.bf16.msra.mxu0 0
    %295 = vmatprep.subr.bf16.mxu0 0
    %296 = vmatpush1.bf16.msra.mxu0 0
    %297 = vmatprep.mubr.bf16.mxu0 0
    %298 = vmatmul.mubr.bf16.gmra.mrb[0].mxu0 %v156
    %v299 = vpop.f32.mrb[0].mxu0
    %v300 = vadd.f32 %v178, %v299
    %v301 = vpop.f32.mrb[0].mxu0
    %v302 = vadd.f32 %v182, %v301
    %v303 = vpop.f32.mrb[0].mxu0
    %v304 = vpop.f32.mrb[0].mxu0
    %305 = vdwg.mxu0
    %v306 = vmax.f32 %v300, 0.0
    %v307 = vmax.f32 %v302, 0.0
    %v308 = vpack.c.bf16 %v306, %v306
    %v309 = vpack.c.bf16 %v307, %v307
    %v310 = vld [vmem:[#allocation5] sm:$0xff]
    %v311 = vld [vmem:[#allocation5 + $0x8] sm:$0xff]
    %v312 = vld [vmem:[#allocation5 + $0x10] sm:$0xff]
    %v313 = vld [vmem:[#allocation5 + $0x18] sm:$0xff]
    %v314 = vld [vmem:[#allocation5 + $0x20] sm:$0xff]
    %v315 = vld [vmem:[#allocation5 + $0x28] sm:$0xff]
    %v316 = vld [vmem:[#allocation5 + $0x30] sm:$0xff]
    %v317 = vld [vmem:[#allocation5 + $0x38] sm:$0xff]
    %v318 = vld [vmem:[#allocation5 + $0x40] sm:$0xff]
    %v319 = vld [vmem:[#allocation5 + $0x48] sm:$0xff]
    %v320 = vld [vmem:[#allocation5 + $0x50] sm:$0xff]
    %v321 = vld [vmem:[#allocation5 + $0x58] sm:$0xff]
    %v322 = vld [vmem:[#allocation5 + $0x60] sm:$0xff]
    %v323 = vld [vmem:[#allocation5 + $0x68] sm:$0xff]
    %v324 = vld [vmem:[#allocation5 + $0x70] sm:$0xff]
    %v325 = vld [vmem:[#allocation5 + $0x78] sm:$0xff]
    %v326 = vld [vmem:[#allocation5 + $0x80] sm:$0xff]
    %v327 = vld [vmem:[#allocation5 + $0x88] sm:$0xff]
    %v328 = vld [vmem:[#allocation5 + $0x90] sm:$0xff]
    %v329 = vld [vmem:[#allocation5 + $0x98] sm:$0xff]
    %v330 = vld [vmem:[#allocation5 + $0xa0] sm:$0xff]
    %v331 = vld [vmem:[#allocation5 + $0xa8] sm:$0xff]
    %v332 = vld [vmem:[#allocation5 + $0xb0] sm:$0xff]
    %v333 = vld [vmem:[#allocation5 + $0xb8] sm:$0xff]
    %v334 = vld [vmem:[#allocation5 + $0xc0] sm:$0xff]
    %v335 = vld [vmem:[#allocation5 + $0xc8] sm:$0xff]
    %v336 = vld [vmem:[#allocation5 + $0xd0] sm:$0xff]
    %v337 = vld [vmem:[#allocation5 + $0xd8] sm:$0xff]
    %v338 = vld [vmem:[#allocation5 + $0xe0] sm:$0xff]
    %v339 = vld [vmem:[#allocation5 + $0xe8] sm:$0xff]
    %v340 = vld [vmem:[#allocation5 + $0xf0] sm:$0xff]
    %v341 = vld [vmem:[#allocation5 + $0xf8] sm:$0xff]
    %v342 = vld [vmem:[#allocation5 + $0x100] sm:$0xff]
    %v343 = vld [vmem:[#allocation5 + $0x108] sm:$0xff]
    %v344 = vld [vmem:[#allocation5 + $0x110] sm:$0xff]
    %v345 = vld [vmem:[#allocation5 + $0x118] sm:$0xff]
    %v346 = vld [vmem:[#allocation5 + $0x120] sm:$0xff]
    %v347 = vld [vmem:[#allocation5 + $0x128] sm:$0xff]
    %v348 = vld [vmem:[#allocation5 + $0x130] sm:$0xff]
    %v349 = vld [vmem:[#allocation5 + $0x138] sm:$0xff]
    %v350 = vld [vmem:[#allocation5 + $0x140] sm:$0xff]
    %v351 = vld [vmem:[#allocation5 + $0x148] sm:$0xff]
    %v352 = vld [vmem:[#allocation5 + $0x150] sm:$0xff]
    %v353 = vld [vmem:[#allocation5 + $0x158] sm:$0xff]
    %v354 = vld [vmem:[#allocation5 + $0x160] sm:$0xff]
    %v355 = vld [vmem:[#allocation5 + $0x168] sm:$0xff]
    %v356 = vld [vmem:[#allocation5 + $0x170] sm:$0xff]
    %v357 = vld [vmem:[#allocation5 + $0x178] sm:$0xff]
    %v358 = vld [vmem:[#allocation5 + $0x180] sm:$0xff]
    %v359 = vld [vmem:[#allocation5 + $0x188] sm:$0xff]
    %v360 = vld [vmem:[#allocation5 + $0x190] sm:$0xff]
    %v361 = vld [vmem:[#allocation5 + $0x198] sm:$0xff]
    %v362 = vld [vmem:[#allocation5 + $0x1a0] sm:$0xff]
    %v363 = vld [vmem:[#allocation5 + $0x1a8] sm:$0xff]
    %v364 = vld [vmem:[#allocation5 + $0x1b0] sm:$0xff]
    %v365 = vld [vmem:[#allocation5 + $0x1b8] sm:$0xff]
    %v366 = vld [vmem:[#allocation5 + $0x1c0] sm:$0xff]
    %v367 = vld [vmem:[#allocation5 + $0x1c8] sm:$0xff]
    %v368 = vld [vmem:[#allocation5 + $0x1d0] sm:$0xff]
    %v369 = vld [vmem:[#allocation5 + $0x1d8] sm:$0xff]
    %v370 = vld [vmem:[#allocation5 + $0x1e0] sm:$0xff]
    %v371 = vld [vmem:[#allocation5 + $0x1e8] sm:$0xff]
    %v372 = vld [vmem:[#allocation5 + $0x1f0] sm:$0xff]
    %v373 = vld [vmem:[#allocation5 + $0x1f8] sm:$0xff]
    %v374 = vld [vmem:[%s7 + $0x3] sm:$0xf]
    %v376 = vlaneseq
    %v377 = vshrl.u32 %v376, 7
    %v378 = vsub.s32 0, %v377
    %v379 = vrot.slane %v374, %v378
    %v380 = vlaneseq
    %v381 = vshrl.u32 %v380, 7
    %v382 = vsub.s32 1, %v381
    %v383 = vrot.slane %v374, %v382
    %v384 = vlaneseq
    %v385 = vshrl.u32 %v384, 7
    %v386 = vsub.s32 2, %v385
    %v387 = vrot.slane %v374, %v386
    %v388 = vlaneseq
    %v389 = vshrl.u32 %v388, 7
    %v390 = vsub.s32 3, %v389
    %v391 = vrot.slane %v374, %v390
    %v460 = vunpack.c.l.b16 %v310
    %v461 = vunpack.c.h.b16 %v310
    %v462 = vunpack.c.l.b16 %v311
    %v463 = vunpack.c.h.b16 %v311
    %v464 = vunpack.c.l.b16 %v312
    %v465 = vunpack.c.h.b16 %v312
    %v466 = vunpack.c.l.b16 %v313
    %v467 = vunpack.c.h.b16 %v313
    %v468 = vunpack.c.l.b16 %v314
    %v469 = vunpack.c.h.b16 %v314
    %v470 = vunpack.c.l.b16 %v315
    %v471 = vunpack.c.h.b16 %v315
    %v472 = vunpack.c.l.b16 %v316
    %v473 = vunpack.c.h.b16 %v316
    %v474 = vunpack.c.l.b16 %v317
    %v475 = vunpack.c.h.b16 %v317
    %v476 = vunpack.c.l.b16 %v318
    %v477 = vunpack.c.h.b16 %v318
    %v478 = vunpack.c.l.b16 %v319
    %v479 = vunpack.c.h.b16 %v319
    %v480 = vunpack.c.l.b16 %v320
    %v481 = vunpack.c.h.b16 %v320
    %v482 = vunpack.c.l.b16 %v321
    %v483 = vunpack.c.h.b16 %v321
    %v484 = vunpack.c.l.b16 %v322
    %v485 = vunpack.c.h.b16 %v322
    %v486 = vunpack.c.l.b16 %v323
    %v487 = vunpack.c.h.b16 %v323
    %v488 = vunpack.c.l.b16 %v324
    %v489 = vunpack.c.h.b16 %v324
    %v490 = vunpack.c.l.b16 %v325
    %v491 = vunpack.c.h.b16 %v325
    %v492 = vunpack.c.l.b16 %v326
    %v493 = vunpack.c.h.b16 %v326
    %v494 = vunpack.c.l.b16 %v327
    %v495 = vunpack.c.h.b16 %v327
    %v496 = vunpack.c.l.b16 %v328
    %v497 = vunpack.c.h.b16 %v328
    %v498 = vunpack.c.l.b16 %v329
    %v499 = vunpack.c.h.b16 %v329
    %v500 = vunpack.c.l.b16 %v330
    %v501 = vunpack.c.h.b16 %v330
    %v502 = vunpack.c.l.b16 %v331
    %v503 = vunpack.c.h.b16 %v331
    %v504 = vunpack.c.l.b16 %v332
    %v505 = vunpack.c.h.b16 %v332
    %v506 = vunpack.c.l.b16 %v333
    %v507 = vunpack.c.h.b16 %v333
    %v508 = vunpack.c.l.b16 %v334
    %v509 = vunpack.c.h.b16 %v334
    %v510 = vunpack.c.l.b16 %v335
    %v511 = vunpack.c.h.b16 %v335
    %v512 = vunpack.c.l.b16 %v336
    %v513 = vunpack.c.h.b16 %v336
    %v514 = vunpack.c.l.b16 %v337
    %v515 = vunpack.c.h.b16 %v337
    %v516 = vunpack.c.l.b16 %v338
    %v517 = vunpack.c.h.b16 %v338
    %v518 = vunpack.c.l.b16 %v339
    %v519 = vunpack.c.h.b16 %v339
    %v520 = vunpack.c.l.b16 %v340
    %v521 = vunpack.c.h.b16 %v340
    %v522 = vunpack.c.l.b16 %v341
    %v523 = vunpack.c.h.b16 %v341
    %v524 = vunpack.c.l.b16 %v342
    %v525 = vunpack.c.h.b16 %v342
    %v526 = vunpack.c.l.b16 %v343
    %v527 = vunpack.c.h.b16 %v343
    %v528 = vunpack.c.l.b16 %v344
    %v529 = vunpack.c.h.b16 %v344
    %v530 = vunpack.c.l.b16 %v345
    %v531 = vunpack.c.h.b16 %v345
    %v532 = vunpack.c.l.b16 %v346
    %v533 = vunpack.c.h.b16 %v346
    %v534 = vunpack.c.l.b16 %v347
    %v535 = vunpack.c.h.b16 %v347
    %v536 = vunpack.c.l.b16 %v348
    %v537 = vunpack.c.h.b16 %v348
    %v538 = vunpack.c.l.b16 %v349
    %v539 = vunpack.c.h.b16 %v349
    %v540 = vunpack.c.l.b16 %v350
    %v541 = vunpack.c.h.b16 %v350
    %v542 = vunpack.c.l.b16 %v351
    %v543 = vunpack.c.h.b16 %v351
    %v544 = vunpack.c.l.b16 %v352
    %v545 = vunpack.c.h.b16 %v352
    %v546 = vunpack.c.l.b16 %v353
    %v547 = vunpack.c.h.b16 %v353
    %v548 = vunpack.c.l.b16 %v354
    %v549 = vunpack.c.h.b16 %v354
    %v550 = vunpack.c.l.b16 %v355
    %v551 = vunpack.c.h.b16 %v355
    %v552 = vunpack.c.l.b16 %v356
    %v553 = vunpack.c.h.b16 %v356
    %v554 = vunpack.c.l.b16 %v357
    %v555 = vunpack.c.h.b16 %v357
    %v556 = vunpack.c.l.b16 %v358
    %v557 = vunpack.c.h.b16 %v358
    %v558 = vunpack.c.l.b16 %v359
    %v559 = vunpack.c.h.b16 %v359
    %v560 = vunpack.c.l.b16 %v360
    %v561 = vunpack.c.h.b16 %v360
    %v562 = vunpack.c.l.b16 %v361
    %v563 = vunpack.c.h.b16 %v361
    %v564 = vunpack.c.l.b16 %v362
    %v565 = vunpack.c.h.b16 %v362
    %v566 = vunpack.c.l.b16 %v363
    %v567 = vunpack.c.h.b16 %v363
    %v568 = vunpack.c.l.b16 %v364
    %v569 = vunpack.c.h.b16 %v364
    %v570 = vunpack.c.l.b16 %v365
    %v571 = vunpack.c.h.b16 %v365
    %v572 = vunpack.c.l.b16 %v366
    %v573 = vunpack.c.h.b16 %v366
    %v574 = vunpack.c.l.b16 %v367
    %v575 = vunpack.c.h.b16 %v367
    %v576 = vunpack.c.l.b16 %v368
    %v577 = vunpack.c.h.b16 %v368
    %v578 = vunpack.c.l.b16 %v369
    %v579 = vunpack.c.h.b16 %v369
    %v580 = vunpack.c.l.b16 %v370
    %v581 = vunpack.c.h.b16 %v370
    %v582 = vunpack.c.l.b16 %v371
    %v583 = vunpack.c.h.b16 %v371
    %v584 = vunpack.c.l.b16 %v372
    %v585 = vunpack.c.h.b16 %v372
    %v586 = vunpack.c.l.b16 %v373
    %v587 = vunpack.c.h.b16 %v373
    %v588 = vpack.c.b16 %v464, %v460
    %v589 = vpack.c.b16 %v465, %v461
    %v590 = vpack.c.b16 %v466, %v462
    %v591 = vpack.c.b16 %v467, %v463
    %v592 = vpack.c.b16 %v472, %v468
    %v593 = vpack.c.b16 %v473, %v469
    %v594 = vpack.c.b16 %v474, %v470
    %v595 = vpack.c.b16 %v475, %v471
    %v596 = vpack.c.b16 %v480, %v476
    %v597 = vpack.c.b16 %v481, %v477
    %v598 = vpack.c.b16 %v482, %v478
    %v599 = vpack.c.b16 %v483, %v479
    %v600 = vpack.c.b16 %v488, %v484
    %v601 = vpack.c.b16 %v489, %v485
    %v602 = vpack.c.b16 %v490, %v486
    %v603 = vpack.c.b16 %v491, %v487
    %v604 = vpack.c.b16 %v496, %v492
    %v605 = vpack.c.b16 %v497, %v493
    %v606 = vpack.c.b16 %v498, %v494
    %v607 = vpack.c.b16 %v499, %v495
    %v608 = vpack.c.b16 %v504, %v500
    %v609 = vpack.c.b16 %v505, %v501
    %v610 = vpack.c.b16 %v506, %v502
    %v611 = vpack.c.b16 %v507, %v503
    %v612 = vpack.c.b16 %v512, %v508
    %v613 = vpack.c.b16 %v513, %v509
    %v614 = vpack.c.b16 %v514, %v510
    %v615 = vpack.c.b16 %v515, %v511
    %v616 = vpack.c.b16 %v520, %v516
    %v617 = vpack.c.b16 %v521, %v517
    %v618 = vpack.c.b16 %v522, %v518
    %v619 = vpack.c.b16 %v523, %v519
    %v620 = vpack.c.b16 %v528, %v524
    %v621 = vpack.c.b16 %v529, %v525
    %v622 = vpack.c.b16 %v530, %v526
    %v623 = vpack.c.b16 %v531, %v527
    %v624 = vpack.c.b16 %v536, %v532
    %v625 = vpack.c.b16 %v537, %v533
    %v626 = vpack.c.b16 %v538, %v534
    %v627 = vpack.c.b16 %v539, %v535
    %v628 = vpack.c.b16 %v544, %v540
    %v629 = vpack.c.b16 %v545, %v541
    %v630 = vpack.c.b16 %v546, %v542
    %v631 = vpack.c.b16 %v547, %v543
    %v632 = vpack.c.b16 %v552, %v548
    %v633 = vpack.c.b16 %v553, %v549
    %v634 = vpack.c.b16 %v554, %v550
    %v635 = vpack.c.b16 %v555, %v551
    %v636 = vpack.c.b16 %v560, %v556
    %v637 = vpack.c.b16 %v561, %v557
    %v638 = vpack.c.b16 %v562, %v558
    %v639 = vpack.c.b16 %v563, %v559
    %v640 = vpack.c.b16 %v568, %v564
    %v641 = vpack.c.b16 %v569, %v565
    %v642 = vpack.c.b16 %v570, %v566
    %v643 = vpack.c.b16 %v571, %v567
    %v644 = vpack.c.b16 %v576, %v572
    %v645 = vpack.c.b16 %v577, %v573
    %v646 = vpack.c.b16 %v578, %v574
    %v647 = vpack.c.b16 %v579, %v575
    %v648 = vpack.c.b16 %v584, %v580
    %v649 = vpack.c.b16 %v585, %v581
    %v650 = vpack.c.b16 %v586, %v582
    %v651 = vpack.c.b16 %v587, %v583
    %716 = vmatprep.subr.bf16.mxu0 %v589
    %717 = vmatpush1.bf16.msra.mxu0 %v588
    %718 = vmatprep.subr.bf16.mxu0 %v593
    %719 = vmatpush1.bf16.msra.mxu0 %v592
    %720 = vmatprep.subr.bf16.mxu0 %v597
    %721 = vmatpush1.bf16.msra.mxu0 %v596
    %722 = vmatprep.subr.bf16.mxu0 %v601
    %723 = vmatpush1.bf16.msra.mxu0 %v600
    %724 = vmatprep.subr.bf16.mxu0 %v605
    %725 = vmatpush1.bf16.msra.mxu0 %v604
    %726 = vmatprep.subr.bf16.mxu0 %v609
    %727 = vmatpush1.bf16.msra.mxu0 %v608
    %728 = vmatprep.subr.bf16.mxu0 %v613
    %729 = vmatpush1.bf16.msra.mxu0 %v612
    %730 = vmatprep.subr.bf16.mxu0 %v617
    %731 = vmatpush1.bf16.msra.mxu0 %v616
    %732 = vmatprep.subr.bf16.mxu0 %v621
    %733 = vmatpush1.bf16.msra.mxu0 %v620
    %734 = vmatprep.subr.bf16.mxu0 %v625
    %735 = vmatpush1.bf16.msra.mxu0 %v624
    %736 = vmatprep.subr.bf16.mxu0 %v629
    %737 = vmatpush1.bf16.msra.mxu0 %v628
    %738 = vmatprep.subr.bf16.mxu0 %v633
    %739 = vmatpush1.bf16.msra.mxu0 %v632
    %740 = vmatprep.subr.bf16.mxu0 %v637
    %741 = vmatpush1.bf16.msra.mxu0 %v636
    %742 = vmatprep.subr.bf16.mxu0 %v641
    %743 = vmatpush1.bf16.msra.mxu0 %v640
    %744 = vmatprep.subr.bf16.mxu0 %v645
    %745 = vmatpush1.bf16.msra.mxu0 %v644
    %746 = vmatprep.subr.bf16.mxu0 %v649
    %747 = vmatpush1.bf16.msra.mxu0 %v648
    %748 = vmatprep.mubr.bf16.mxu0 %v309
    %749 = vmatmul.mubr.bf16.gmra.mrb[0].mxu0 %v308
    %v750 = vpop.f32.mrb[0].mxu0
    %v751 = vadd.f32 %v379, %v750
    %v752 = vpop.f32.mrb[0].mxu0
    %v753 = vadd.f32 %v383, %v752
    %v754 = vpop.f32.mrb[0].mxu0
    %v755 = vpop.f32.mrb[0].mxu0
    %756 = vdwg.mxu0
    %757 = vmatprep.subr.bf16.mxu0 %v591
    %758 = vmatpush1.bf16.msra.mxu0 %v590
    %759 = vmatprep.subr.bf16.mxu0 %v595
    %760 = vmatpush1.bf16.msra.mxu0 %v594
    %761 = vmatprep.subr.bf16.mxu0 %v599
    %762 = vmatpush1.bf16.msra.mxu0 %v598
    %763 = vmatprep.subr.bf16.mxu0 %v603
    %764 = vmatpush1.bf16.msra.mxu0 %v602
    %765 = vmatprep.subr.bf16.mxu0 %v607
    %766 = vmatpush1.bf16.msra.mxu0 %v606
    %767 = vmatprep.subr.bf16.mxu0 %v611
    %768 = vmatpush1.bf16.msra.mxu0 %v610
    %769 = vmatprep.subr.bf16.mxu0 %v615
    %770 = vmatpush1.bf16.msra.mxu0 %v614
    %771 = vmatprep.subr.bf16.mxu0 %v619
    %772 = vmatpush1.bf16.msra.mxu0 %v618
    %773 = vmatprep.subr.bf16.mxu0 %v623
    %774 = vmatpush1.bf16.msra.mxu0 %v622
    %775 = vmatprep.subr.bf16.mxu0 %v627
    %776 = vmatpush1.bf16.msra.mxu0 %v626
    %777 = vmatprep.subr.bf16.mxu0 %v631
    %778 = vmatpush1.bf16.msra.mxu0 %v630
    %779 = vmatprep.subr.bf16.mxu0 %v635
    %780 = vmatpush1.bf16.msra.mxu0 %v634
    %781 = vmatprep.subr.bf16.mxu0 %v639
    %782 = vmatpush1.bf16.msra.mxu0 %v638
    %783 = vmatprep.subr.bf16.mxu0 %v643
    %784 = vmatpush1.bf16.msra.mxu0 %v642
    %785 = vmatprep.subr.bf16.mxu0 %v647
    %786 = vmatpush1.bf16.msra.mxu0 %v646
    %787 = vmatprep.subr.bf16.mxu0 %v651
    %788 = vmatpush1.bf16.msra.mxu0 %v650
    %789 = vmatprep.mubr.bf16.mxu0 %v309
    %790 = vmatmul.mubr.bf16.gmra.mrb[0].mxu0 %v308
    %v791 = vpop.f32.mrb[0].mxu0
    %v792 = vadd.f32 %v387, %v791
    %v793 = vpop.f32.mrb[0].mxu0
    %v794 = vadd.f32 %v391, %v793
    %v795 = vpop.f32.mrb[0].mxu0
    %v796 = vpop.f32.mrb[0].mxu0
    %797 = vdwg.mxu0
    %v798 = vmax.f32 %v751, 0.0
    %v799 = vmax.f32 %v753, 0.0
    %v800 = vmax.f32 %v792, 0.0
    %v801 = vmax.f32 %v794, 0.0
    %v802 = vpack.c.bf16 %v798, %v798
    %v803 = vpack.c.bf16 %v799, %v799
    %v804 = vpack.c.bf16 %v800, %v800
    %v805 = vpack.c.bf16 %v801, %v801
    %v806 = vld [vmem:[#allocation7] sm:$0xff]
    %v807 = vld [vmem:[#allocation7 + $0x8] sm:$0xff]
    %v808 = vld [vmem:[#allocation7 + $0x10] sm:$0xff]
    %v809 = vld [vmem:[#allocation7 + $0x18] sm:$0xff]
    %v810 = vld [vmem:[#allocation7 + $0x20] sm:$0xff]
    %v811 = vld [vmem:[#allocation7 + $0x28] sm:$0xff]
    %v812 = vld [vmem:[#allocation7 + $0x30] sm:$0xff]
    %v813 = vld [vmem:[#allocation7 + $0x38] sm:$0xff]
    %v814 = vld [vmem:[#allocation7 + $0x40] sm:$0xff]
    %v815 = vld [vmem:[#allocation7 + $0x48] sm:$0xff]
    %v816 = vld [vmem:[#allocation7 + $0x50] sm:$0xff]
    %v817 = vld [vmem:[#allocation7 + $0x58] sm:$0xff]
    %v818 = vld [vmem:[#allocation7 + $0x60] sm:$0xff]
    %v819 = vld [vmem:[#allocation7 + $0x68] sm:$0xff]
    %v820 = vld [vmem:[#allocation7 + $0x70] sm:$0xff]
    %v821 = vld [vmem:[#allocation7 + $0x78] sm:$0xff]
    %v822 = vld [vmem:[#allocation7 + $0x80] sm:$0xff]
    %v823 = vld [vmem:[#allocation7 + $0x88] sm:$0xff]
    %v824 = vld [vmem:[#allocation7 + $0x90] sm:$0xff]
    %v825 = vld [vmem:[#allocation7 + $0x98] sm:$0xff]
    %v826 = vld [vmem:[#allocation7 + $0xa0] sm:$0xff]
    %v827 = vld [vmem:[#allocation7 + $0xa8] sm:$0xff]
    %v828 = vld [vmem:[#allocation7 + $0xb0] sm:$0xff]
    %v829 = vld [vmem:[#allocation7 + $0xb8] sm:$0xff]
    %v830 = vld [vmem:[#allocation7 + $0xc0] sm:$0xff]
    %v831 = vld [vmem:[#allocation7 + $0xc8] sm:$0xff]
    %v832 = vld [vmem:[#allocation7 + $0xd0] sm:$0xff]
    %v833 = vld [vmem:[#allocation7 + $0xd8] sm:$0xff]
    %v834 = vld [vmem:[#allocation7 + $0xe0] sm:$0xff]
    %v835 = vld [vmem:[#allocation7 + $0xe8] sm:$0xff]
    %v836 = vld [vmem:[#allocation7 + $0xf0] sm:$0xff]
    %v837 = vld [vmem:[#allocation7 + $0xf8] sm:$0xff]
    %v838 = vld [vmem:[#allocation7 + $0x100] sm:$0xff]
    %v839 = vld [vmem:[#allocation7 + $0x108] sm:$0xff]
    %v840 = vld [vmem:[#allocation7 + $0x110] sm:$0xff]
    %v841 = vld [vmem:[#allocation7 + $0x118] sm:$0xff]
    %v842 = vld [vmem:[#allocation7 + $0x120] sm:$0xff]
    %v843 = vld [vmem:[#allocation7 + $0x128] sm:$0xff]
    %v844 = vld [vmem:[#allocation7 + $0x130] sm:$0xff]
    %v845 = vld [vmem:[#allocation7 + $0x138] sm:$0xff]
    %v846 = vld [vmem:[#allocation7 + $0x140] sm:$0xff]
    %v847 = vld [vmem:[#allocation7 + $0x148] sm:$0xff]
    %v848 = vld [vmem:[#allocation7 + $0x150] sm:$0xff]
    %v849 = vld [vmem:[#allocation7 + $0x158] sm:$0xff]
    %v850 = vld [vmem:[#allocation7 + $0x160] sm:$0xff]
    %v851 = vld [vmem:[#allocation7 + $0x168] sm:$0xff]
    %v852 = vld [vmem:[#allocation7 + $0x170] sm:$0xff]
    %v853 = vld [vmem:[#allocation7 + $0x178] sm:$0xff]
    %v854 = vld [vmem:[#allocation7 + $0x180] sm:$0xff]
    %v855 = vld [vmem:[#allocation7 + $0x188] sm:$0xff]
    %v856 = vld [vmem:[#allocation7 + $0x190] sm:$0xff]
    %v857 = vld [vmem:[#allocation7 + $0x198] sm:$0xff]
    %v858 = vld [vmem:[#allocation7 + $0x1a0] sm:$0xff]
    %v859 = vld [vmem:[#allocation7 + $0x1a8] sm:$0xff]
    %v860 = vld [vmem:[#allocation7 + $0x1b0] sm:$0xff]
    %v861 = vld [vmem:[#allocation7 + $0x1b8] sm:$0xff]
    %v862 = vld [vmem:[#allocation7 + $0x1c0] sm:$0xff]
    %v863 = vld [vmem:[#allocation7 + $0x1c8] sm:$0xff]
    %v864 = vld [vmem:[#allocation7 + $0x1d0] sm:$0xff]
    %v865 = vld [vmem:[#allocation7 + $0x1d8] sm:$0xff]
    %v866 = vld [vmem:[#allocation7 + $0x1e0] sm:$0xff]
    %v867 = vld [vmem:[#allocation7 + $0x1e8] sm:$0xff]
    %v868 = vld [vmem:[#allocation7 + $0x1f0] sm:$0xff]
    %v869 = vld [vmem:[#allocation7 + $0x1f8] sm:$0xff]
    %v870 = vld [vmem:[%s7 + $0x7] sm:$0x3]
    %v872 = vlaneseq
    %v873 = vshrl.u32 %v872, 7
    %v874 = vsub.s32 0, %v873
    %v875 = vrot.slane %v870, %v874
    %v876 = vlaneseq
    %v877 = vshrl.u32 %v876, 7
    %v878 = vsub.s32 1, %v877
    %v879 = vrot.slane %v870, %v878
    %v946 = vunpack.c.l.b16 %v806
    %v947 = vunpack.c.h.b16 %v806
    %v948 = vunpack.c.l.b16 %v807
    %v949 = vunpack.c.h.b16 %v807
    %v950 = vunpack.c.l.b16 %v808
    %v951 = vunpack.c.h.b16 %v808
    %v952 = vunpack.c.l.b16 %v809
    %v953 = vunpack.c.h.b16 %v809
    %v954 = vunpack.c.l.b16 %v810
    %v955 = vunpack.c.h.b16 %v810
    %v956 = vunpack.c.l.b16 %v811
    %v957 = vunpack.c.h.b16 %v811
    %v958 = vunpack.c.l.b16 %v812
    %v959 = vunpack.c.h.b16 %v812
    %v960 = vunpack.c.l.b16 %v813
    %v961 = vunpack.c.h.b16 %v813
    %v962 = vunpack.c.l.b16 %v814
    %v963 = vunpack.c.h.b16 %v814
    %v964 = vunpack.c.l.b16 %v815
    %v965 = vunpack.c.h.b16 %v815
    %v966 = vunpack.c.l.b16 %v816
    %v967 = vunpack.c.h.b16 %v816
    %v968 = vunpack.c.l.b16 %v817
    %v969 = vunpack.c.h.b16 %v817
    %v970 = vunpack.c.l.b16 %v818
    %v971 = vunpack.c.h.b16 %v818
    %v972 = vunpack.c.l.b16 %v819
    %v973 = vunpack.c.h.b16 %v819
    %v974 = vunpack.c.l.b16 %v820
    %v975 = vunpack.c.h.b16 %v820
    %v976 = vunpack.c.l.b16 %v821
    %v977 = vunpack.c.h.b16 %v821
    %v978 = vunpack.c.l.b16 %v822
    %v979 = vunpack.c.h.b16 %v822
    %v980 = vunpack.c.l.b16 %v823
    %v981 = vunpack.c.h.b16 %v823
    %v982 = vunpack.c.l.b16 %v824
    %v983 = vunpack.c.h.b16 %v824
    %v984 = vunpack.c.l.b16 %v825
    %v985 = vunpack.c.h.b16 %v825
    %v986 = vunpack.c.l.b16 %v826
    %v987 = vunpack.c.h.b16 %v826
    %v988 = vunpack.c.l.b16 %v827
    %v989 = vunpack.c.h.b16 %v827
    %v990 = vunpack.c.l.b16 %v828
    %v991 = vunpack.c.h.b16 %v828
    %v992 = vunpack.c.l.b16 %v829
    %v993 = vunpack.c.h.b16 %v829
    %v994 = vunpack.c.l.b16 %v830
    %v995 = vunpack.c.h.b16 %v830
    %v996 = vunpack.c.l.b16 %v831
    %v997 = vunpack.c.h.b16 %v831
    %v998 = vunpack.c.l.b16 %v832
    %v999 = vunpack.c.h.b16 %v832
    %v1000 = vunpack.c.l.b16 %v833
    %v1001 = vunpack.c.h.b16 %v833
    %v1002 = vunpack.c.l.b16 %v834
    %v1003 = vunpack.c.h.b16 %v834
    %v1004 = vunpack.c.l.b16 %v835
    %v1005 = vunpack.c.h.b16 %v835
    %v1006 = vunpack.c.l.b16 %v836
    %v1007 = vunpack.c.h.b16 %v836
    %v1008 = vunpack.c.l.b16 %v837
    %v1009 = vunpack.c.h.b16 %v837
    %v1010 = vunpack.c.l.b16 %v838
    %v1011 = vunpack.c.h.b16 %v838
    %v1012 = vunpack.c.l.b16 %v839
    %v1013 = vunpack.c.h.b16 %v839
    %v1014 = vunpack.c.l.b16 %v840
    %v1015 = vunpack.c.h.b16 %v840
    %v1016 = vunpack.c.l.b16 %v841
    %v1017 = vunpack.c.h.b16 %v841
    %v1018 = vunpack.c.l.b16 %v842
    %v1019 = vunpack.c.h.b16 %v842
    %v1020 = vunpack.c.l.b16 %v843
    %v1021 = vunpack.c.h.b16 %v843
    %v1022 = vunpack.c.l.b16 %v844
    %v1023 = vunpack.c.h.b16 %v844
    %v1024 = vunpack.c.l.b16 %v845
    %v1025 = vunpack.c.h.b16 %v845
    %v1026 = vunpack.c.l.b16 %v846
    %v1027 = vunpack.c.h.b16 %v846
    %v1028 = vunpack.c.l.b16 %v847
    %v1029 = vunpack.c.h.b16 %v847
    %v1030 = vunpack.c.l.b16 %v848
    %v1031 = vunpack.c.h.b16 %v848
    %v1032 = vunpack.c.l.b16 %v849
    %v1033 = vunpack.c.h.b16 %v849
    %v1034 = vunpack.c.l.b16 %v850
    %v1035 = vunpack.c.h.b16 %v850
    %v1036 = vunpack.c.l.b16 %v851
    %v1037 = vunpack.c.h.b16 %v851
    %v1038 = vunpack.c.l.b16 %v852
    %v1039 = vunpack.c.h.b16 %v852
    %v1040 = vunpack.c.l.b16 %v853
    %v1041 = vunpack.c.h.b16 %v853
    %v1042 = vunpack.c.l.b16 %v854
    %v1043 = vunpack.c.h.b16 %v854
    %v1044 = vunpack.c.l.b16 %v855
    %v1045 = vunpack.c.h.b16 %v855
    %v1046 = vunpack.c.l.b16 %v856
    %v1047 = vunpack.c.h.b16 %v856
    %v1048 = vunpack.c.l.b16 %v857
    %v1049 = vunpack.c.h.b16 %v857
    %v1050 = vunpack.c.l.b16 %v858
    %v1051 = vunpack.c.h.b16 %v858
    %v1052 = vunpack.c.l.b16 %v859
    %v1053 = vunpack.c.h.b16 %v859
    %v1054 = vunpack.c.l.b16 %v860
    %v1055 = vunpack.c.h.b16 %v860
    %v1056 = vunpack.c.l.b16 %v861
    %v1057 = vunpack.c.h.b16 %v861
    %v1058 = vunpack.c.l.b16 %v862
    %v1059 = vunpack.c.h.b16 %v862
    %v1060 = vunpack.c.l.b16 %v863
    %v1061 = vunpack.c.h.b16 %v863
    %v1062 = vunpack.c.l.b16 %v864
    %v1063 = vunpack.c.h.b16 %v864
    %v1064 = vunpack.c.l.b16 %v865
    %v1065 = vunpack.c.h.b16 %v865
    %v1066 = vunpack.c.l.b16 %v866
    %v1067 = vunpack.c.h.b16 %v866
    %v1068 = vunpack.c.l.b16 %v867
    %v1069 = vunpack.c.h.b16 %v867
    %v1070 = vunpack.c.l.b16 %v868
    %v1071 = vunpack.c.h.b16 %v868
    %v1072 = vunpack.c.l.b16 %v869
    %v1073 = vunpack.c.h.b16 %v869
    %v1074 = vpack.c.b16 %v948, %v946
    %v1075 = vpack.c.b16 %v949, %v947
    %v1076 = vpack.c.b16 %v952, %v950
    %v1077 = vpack.c.b16 %v953, %v951
    %v1078 = vpack.c.b16 %v956, %v954
    %v1079 = vpack.c.b16 %v957, %v955
    %v1080 = vpack.c.b16 %v960, %v958
    %v1081 = vpack.c.b16 %v961, %v959
    %v1082 = vpack.c.b16 %v964, %v962
    %v1083 = vpack.c.b16 %v965, %v963
    %v1084 = vpack.c.b16 %v968, %v966
    %v1085 = vpack.c.b16 %v969, %v967
    %v1086 = vpack.c.b16 %v972, %v970
    %v1087 = vpack.c.b16 %v973, %v971
    %v1088 = vpack.c.b16 %v976, %v974
    %v1089 = vpack.c.b16 %v977, %v975
    %v1090 = vpack.c.b16 %v980, %v978
    %v1091 = vpack.c.b16 %v981, %v979
    %v1092 = vpack.c.b16 %v984, %v982
    %v1093 = vpack.c.b16 %v985, %v983
    %v1094 = vpack.c.b16 %v988, %v986
    %v1095 = vpack.c.b16 %v989, %v987
    %v1096 = vpack.c.b16 %v992, %v990
    %v1097 = vpack.c.b16 %v993, %v991
    %v1098 = vpack.c.b16 %v996, %v994
    %v1099 = vpack.c.b16 %v997, %v995
    %v1100 = vpack.c.b16 %v1000, %v998
    %v1101 = vpack.c.b16 %v1001, %v999
    %v1102 = vpack.c.b16 %v1004, %v1002
    %v1103 = vpack.c.b16 %v1005, %v1003
    %v1104 = vpack.c.b16 %v1008, %v1006
    %v1105 = vpack.c.b16 %v1009, %v1007
    %v1106 = vpack.c.b16 %v1012, %v1010
    %v1107 = vpack.c.b16 %v1013, %v1011
    %v1108 = vpack.c.b16 %v1016, %v1014
    %v1109 = vpack.c.b16 %v1017, %v1015
    %v1110 = vpack.c.b16 %v1020, %v1018
    %v1111 = vpack.c.b16 %v1021, %v1019
    %v1112 = vpack.c.b16 %v1024, %v1022
    %v1113 = vpack.c.b16 %v1025, %v1023
    %v1114 = vpack.c.b16 %v1028, %v1026
    %v1115 = vpack.c.b16 %v1029, %v1027
    %v1116 = vpack.c.b16 %v1032, %v1030
    %v1117 = vpack.c.b16 %v1033, %v1031
    %v1118 = vpack.c.b16 %v1036, %v1034
    %v1119 = vpack.c.b16 %v1037, %v1035
    %v1120 = vpack.c.b16 %v1040, %v1038
    %v1121 = vpack.c.b16 %v1041, %v1039
    %v1122 = vpack.c.b16 %v1044, %v1042
    %v1123 = vpack.c.b16 %v1045, %v1043
    %v1124 = vpack.c.b16 %v1048, %v1046
    %v1125 = vpack.c.b16 %v1049, %v1047
    %v1126 = vpack.c.b16 %v1052, %v1050
    %v1127 = vpack.c.b16 %v1053, %v1051
    %v1128 = vpack.c.b16 %v1056, %v1054
    %v1129 = vpack.c.b16 %v1057, %v1055
    %v1130 = vpack.c.b16 %v1060, %v1058
    %v1131 = vpack.c.b16 %v1061, %v1059
    %v1132 = vpack.c.b16 %v1064, %v1062
    %v1133 = vpack.c.b16 %v1065, %v1063
    %v1134 = vpack.c.b16 %v1068, %v1066
    %v1135 = vpack.c.b16 %v1069, %v1067
    %v1136 = vpack.c.b16 %v1072, %v1070
    %v1137 = vpack.c.b16 %v1073, %v1071
    %1202 = vmatprep.subr.bf16.mxu0 %v1075
    %1203 = vmatpush1.bf16.msra.mxu0 %v1074
    %1204 = vmatprep.subr.bf16.mxu0 %v1077
    %1205 = vmatpush1.bf16.msra.mxu0 %v1076
    %1206 = vmatprep.subr.bf16.mxu0 %v1079
    %1207 = vmatpush1.bf16.msra.mxu0 %v1078
    %1208 = vmatprep.subr.bf16.mxu0 %v1081
    %1209 = vmatpush1.bf16.msra.mxu0 %v1080
    %1210 = vmatprep.subr.bf16.mxu0 %v1083
    %1211 = vmatpush1.bf16.msra.mxu0 %v1082
    %1212 = vmatprep.subr.bf16.mxu0 %v1085
    %1213 = vmatpush1.bf16.msra.mxu0 %v1084
    %1214 = vmatprep.subr.bf16.mxu0 %v1087
    %1215 = vmatpush1.bf16.msra.mxu0 %v1086
    %1216 = vmatprep.subr.bf16.mxu0 %v1089
    %1217 = vmatpush1.bf16.msra.mxu0 %v1088
    %1218 = vmatprep.subr.bf16.mxu0 %v1091
    %1219 = vmatpush1.bf16.msra.mxu0 %v1090
    %1220 = vmatprep.subr.bf16.mxu0 %v1093
    %1221 = vmatpush1.bf16.msra.mxu0 %v1092
    %1222 = vmatprep.subr.bf16.mxu0 %v1095
    %1223 = vmatpush1.bf16.msra.mxu0 %v1094
    %1224 = vmatprep.subr.bf16.mxu0 %v1097
    %1225 = vmatpush1.bf16.msra.mxu0 %v1096
    %1226 = vmatprep.subr.bf16.mxu0 %v1099
    %1227 = vmatpush1.bf16.msra.mxu0 %v1098
    %1228 = vmatprep.subr.bf16.mxu0 %v1101
    %1229 = vmatpush1.bf16.msra.mxu0 %v1100
    %1230 = vmatprep.subr.bf16.mxu0 %v1103
    %1231 = vmatpush1.bf16.msra.mxu0 %v1102
    %1232 = vmatprep.subr.bf16.mxu0 %v1105
    %1233 = vmatpush1.bf16.msra.mxu0 %v1104
    %1234 = vmatprep.mubr.bf16.mxu0 %v803
    %1235 = vmatmul.mubr.bf16.gmra.mrb[0].mxu0 %v802
    %v1236 = vpop.f32.mrb[0].mxu0
    %v1237 = vadd.f32 %v875, %v1236
    %v1238 = vpop.f32.mrb[0].mxu0
    %v1239 = vadd.f32 %v879, %v1238
    %v1240 = vpop.f32.mrb[0].mxu0
    %v1241 = vpop.f32.mrb[0].mxu0
    %1242 = vdwg.mxu0
    %1243 = vmatprep.subr.bf16.mxu0 %v1107
    %1244 = vmatpush1.bf16.msra.mxu0 %v1106
    %1245 = vmatprep.subr.bf16.mxu0 %v1109
    %1246 = vmatpush1.bf16.msra.mxu0 %v1108
    %1247 = vmatprep.subr.bf16.mxu0 %v1111
    %1248 = vmatpush1.bf16.msra.mxu0 %v1110
    %1249 = vmatprep.subr.bf16.mxu0 %v1113
    %1250 = vmatpush1.bf16.msra.mxu0 %v1112
    %1251 = vmatprep.subr.bf16.mxu0 %v1115
    %1252 = vmatpush1.bf16.msra.mxu0 %v1114
    %1253 = vmatprep.subr.bf16.mxu0 %v1117
    %1254 = vmatpush1.bf16.msra.mxu0 %v1116
    %1255 = vmatprep.subr.bf16.mxu0 %v1119
    %1256 = vmatpush1.bf16.msra.mxu0 %v1118
    %1257 = vmatprep.subr.bf16.mxu0 %v1121
    %1258 = vmatpush1.bf16.msra.mxu0 %v1120
    %1259 = vmatprep.subr.bf16.mxu0 %v1123
    %1260 = vmatpush1.bf16.msra.mxu0 %v1122
    %1261 = vmatprep.subr.bf16.mxu0 %v1125
    %1262 = vmatpush1.bf16.msra.mxu0 %v1124
    %1263 = vmatprep.subr.bf16.mxu0 %v1127
    %1264 = vmatpush1.bf16.msra.mxu0 %v1126
    %1265 = vmatprep.subr.bf16.mxu0 %v1129
    %1266 = vmatpush1.bf16.msra.mxu0 %v1128
    %1267 = vmatprep.subr.bf16.mxu0 %v1131
    %1268 = vmatpush1.bf16.msra.mxu0 %v1130
    %1269 = vmatprep.subr.bf16.mxu0 %v1133
    %1270 = vmatpush1.bf16.msra.mxu0 %v1132
    %1271 = vmatprep.subr.bf16.mxu0 %v1135
    %1272 = vmatpush1.bf16.msra.mxu0 %v1134
    %1273 = vmatprep.subr.bf16.mxu0 %v1137
    %1274 = vmatpush1.bf16.msra.mxu0 %v1136
    %1275 = vmatprep.mubr.bf16.mxu0 %v805
    %1276 = vmatmul.mubr.bf16.gmra.mrb[0].mxu0 %v804
    %v1277 = vpop.f32.mrb[0].mxu0
    %v1278 = vadd.f32 %v1237, %v1277
    %v1279 = vpop.f32.mrb[0].mxu0
    %v1280 = vadd.f32 %v1239, %v1279
    %v1281 = vpop.f32.mrb[0].mxu0
    %v1282 = vpop.f32.mrb[0].mxu0
    %1283 = vdwg.mxu0
    %v1284 = vmax.f32 %v1278, 0.0
    %v1285 = vmax.f32 %v1280, 0.0
    %v1286 = vpack.c.bf16 %v1284, %v1284
    %v1287 = vpack.c.bf16 %v1285, %v1285
    %v1288 = vld [vmem:[#allocation8] sm:$0xf]
    %v1289 = vld [vmem:[#allocation8 + $0x4] sm:$0xf]
    %v1290 = vld [vmem:[#allocation8 + $0x8] sm:$0xf]
    %v1291 = vld [vmem:[#allocation8 + $0xc] sm:$0xf]
    %v1292 = vld [vmem:[#allocation8 + $0x10] sm:$0xf]
    %v1293 = vld [vmem:[#allocation8 + $0x14] sm:$0xf]
    %v1294 = vld [vmem:[#allocation8 + $0x18] sm:$0xf]
    %v1295 = vld [vmem:[#allocation8 + $0x1c] sm:$0xf]
    %v1296 = vld [vmem:[#allocation8 + $0x20] sm:$0xf]
    %v1297 = vld [vmem:[#allocation8 + $0x24] sm:$0xf]
    %v1298 = vld [vmem:[#allocation8 + $0x28] sm:$0xf]
    %v1299 = vld [vmem:[#allocation8 + $0x2c] sm:$0xf]
    %v1300 = vld [vmem:[#allocation8 + $0x30] sm:$0xf]
    %v1301 = vld [vmem:[#allocation8 + $0x34] sm:$0xf]
    %v1302 = vld [vmem:[#allocation8 + $0x38] sm:$0xf]
    %v1303 = vld [vmem:[#allocation8 + $0x3c] sm:$0xf]
    %v1304 = vld [vmem:[#allocation8 + $0x40] sm:$0xf]
    %v1305 = vld [vmem:[#allocation8 + $0x44] sm:$0xf]
    %v1306 = vld [vmem:[#allocation8 + $0x48] sm:$0xf]
    %v1307 = vld [vmem:[#allocation8 + $0x4c] sm:$0xf]
    %v1308 = vld [vmem:[#allocation8 + $0x50] sm:$0xf]
    %v1309 = vld [vmem:[#allocation8 + $0x54] sm:$0xf]
    %v1310 = vld [vmem:[#allocation8 + $0x58] sm:$0xf]
    %v1311 = vld [vmem:[#allocation8 + $0x5c] sm:$0xf]
    %v1312 = vld [vmem:[#allocation8 + $0x60] sm:$0xf]
    %v1313 = vld [vmem:[#allocation8 + $0x64] sm:$0xf]
    %v1314 = vld [vmem:[#allocation8 + $0x68] sm:$0xf]
    %v1315 = vld [vmem:[#allocation8 + $0x6c] sm:$0xf]
    %v1316 = vld [vmem:[#allocation8 + $0x70] sm:$0xf]
    %v1317 = vld [vmem:[#allocation8 + $0x74] sm:$0xf]
    %v1318 = vld [vmem:[#allocation8 + $0x78] sm:$0xf]
    %v1319 = vld [vmem:[#allocation8 + $0x7c] sm:$0xf]
    %v1320 = vld [vmem:[%s7 + $0x9] sm:$0x1]
    %v1322 = vlaneseq
    %v1323 = vshrl.u32 %v1322, 7
    %v1324 = vsub.s32 0, %v1323
    %v1325 = vrot.slane %v1320, %v1324
    %v1359 = vunpack.c.l.b16 %v1288
    %v1360 = vunpack.c.l.b16 %v1289
    %v1361 = vunpack.c.l.b16 %v1290
    %v1362 = vunpack.c.l.b16 %v1291
    %v1363 = vunpack.c.l.b16 %v1292
    %v1364 = vunpack.c.l.b16 %v1293
    %v1365 = vunpack.c.l.b16 %v1294
    %v1366 = vunpack.c.l.b16 %v1295
    %v1367 = vunpack.c.l.b16 %v1296
    %v1368 = vunpack.c.l.b16 %v1297
    %v1369 = vunpack.c.l.b16 %v1298
    %v1370 = vunpack.c.l.b16 %v1299
    %v1371 = vunpack.c.l.b16 %v1300
    %v1372 = vunpack.c.l.b16 %v1301
    %v1373 = vunpack.c.l.b16 %v1302
    %v1374 = vunpack.c.l.b16 %v1303
    %v1375 = vunpack.c.l.b16 %v1304
    %v1376 = vunpack.c.l.b16 %v1305
    %v1377 = vunpack.c.l.b16 %v1306
    %v1378 = vunpack.c.l.b16 %v1307
    %v1379 = vunpack.c.l.b16 %v1308
    %v1380 = vunpack.c.l.b16 %v1309
    %v1381 = vunpack.c.l.b16 %v1310
    %v1382 = vunpack.c.l.b16 %v1311
    %v1383 = vunpack.c.l.b16 %v1312
    %v1384 = vunpack.c.l.b16 %v1313
    %v1385 = vunpack.c.l.b16 %v1314
    %v1386 = vunpack.c.l.b16 %v1315
    %v1387 = vunpack.c.l.b16 %v1316
    %v1388 = vunpack.c.l.b16 %v1317
    %v1389 = vunpack.c.l.b16 %v1318
    %v1390 = vunpack.c.l.b16 %v1319
    %v1391 = vpack.c.b16 %v1360, %v1359
    %v1392 = vpack.c.b16 %v1362, %v1361
    %v1393 = vpack.c.b16 %v1364, %v1363
    %v1394 = vpack.c.b16 %v1366, %v1365
    %v1395 = vpack.c.b16 %v1368, %v1367
    %v1396 = vpack.c.b16 %v1370, %v1369
    %v1397 = vpack.c.b16 %v1372, %v1371
    %v1398 = vpack.c.b16 %v1374, %v1373
    %v1399 = vpack.c.b16 %v1376, %v1375
    %v1400 = vpack.c.b16 %v1378, %v1377
    %v1401 = vpack.c.b16 %v1380, %v1379
    %v1402 = vpack.c.b16 %v1382, %v1381
    %v1403 = vpack.c.b16 %v1384, %v1383
    %v1404 = vpack.c.b16 %v1386, %v1385
    %v1405 = vpack.c.b16 %v1388, %v1387
    %v1406 = vpack.c.b16 %v1390, %v1389
    %1423 = vmatprep.subr.bf16.mxu0 0
    %1424 = vmatpush1.bf16.msra.mxu0 %v1391
    %1425 = vmatprep.subr.bf16.mxu0 0
    %1426 = vmatpush1.bf16.msra.mxu0 %v1392
    %1427 = vmatprep.subr.bf16.mxu0 0
    %1428 = vmatpush1.bf16.msra.mxu0 %v1393
    %1429 = vmatprep.subr.bf16.mxu0 0
    %1430 = vmatpush1.bf16.msra.mxu0 %v1394
    %1431 = vmatprep.subr.bf16.mxu0 0
    %1432 = vmatpush1.bf16.msra.mxu0 %v1395
    %1433 = vmatprep.subr.bf16.mxu0 0
    %1434 = vmatpush1.bf16.msra.mxu0 %v1396
    %1435 = vmatprep.subr.bf16.mxu0 0
    %1436 = vmatpush1.bf16.msra.mxu0 %v1397
    %1437 = vmatprep.subr.bf16.mxu0 0
    %1438 = vmatpush1.bf16.msra.mxu0 %v1398
    %1439 = vmatprep.subr.bf16.mxu0 0
    %1440 = vmatpush1.bf16.msra.mxu0 %v1399
    %1441 = vmatprep.subr.bf16.mxu0 0
    %1442 = vmatpush1.bf16.msra.mxu0 %v1400
    %1443 = vmatprep.subr.bf16.mxu0 0
    %1444 = vmatpush1.bf16.msra.mxu0 %v1401
    %1445 = vmatprep.subr.bf16.mxu0 0
    %1446 = vmatpush1.bf16.msra.mxu0 %v1402
    %1447 = vmatprep.subr.bf16.mxu0 0
    %1448 = vmatpush1.bf16.msra.mxu0 %v1403
    %1449 = vmatprep.subr.bf16.mxu0 0
    %1450 = vmatpush1.bf16.msra.mxu0 %v1404
    %1451 = vmatprep.subr.bf16.mxu0 0
    %1452 = vmatpush1.bf16.msra.mxu0 %v1405
    %1453 = vmatprep.subr.bf16.mxu0 0
    %1454 = vmatpush1.bf16.msra.mxu0 %v1406
    %1455 = vmatprep.mubr.bf16.mxu0 %v1287
    %1456 = vmatmul.mubr.bf16.gmra.mrb[0].mxu0 %v1286
    %v1457 = vpop.f32.mrb[0].mxu0
    %v1458 = vadd.f32 %v1325, %v1457
    %v1459 = vpop.f32.mrb[0].mxu0
    %v1460 = vpop.f32.mrb[0].mxu0
    %v1461 = vpop.f32.mrb[0].mxu0
    %1462 = vdwg.mxu0
    %v1463 = vmax.f32 %v1458, 0.0
    %v1464 = vpack.c.bf16 %v1463, %v1463
    %v1465 = vld [vmem:[%s6] sm:$0xf]
    %v1466 = vld [vmem:[%s6 + $0x4] sm:$0xf]
    %v1467 = vld [vmem:[%s6 + $0x8] sm:$0xf]
    %v1468 = vld [vmem:[%s6 + $0xc] sm:$0xf]
    %v1469 = vld [vmem:[%s6 + $0x10] sm:$0xf]
    %v1470 = vld [vmem:[%s6 + $0x14] sm:$0xf]
    %v1471 = vld [vmem:[%s6 + $0x18] sm:$0xf]
    %v1472 = vld [vmem:[%s6 + $0x1c] sm:$0xf]
    %v1473 = vld [vmem:[%s6 + $0x20] sm:$0xf]
    %v1474 = vld [vmem:[%s6 + $0x24] sm:$0xf]
    %v1475 = vld [vmem:[%s6 + $0x28] sm:$0xf]
    %v1476 = vld [vmem:[%s6 + $0x2c] sm:$0xf]
    %v1477 = vld [vmem:[%s6 + $0x30] sm:$0xf]
    %v1478 = vld [vmem:[%s6 + $0x34] sm:$0xf]
    %v1479 = vld [vmem:[%s6 + $0x38] sm:$0xf]
    %v1480 = vld [vmem:[%s6 + $0x3c] sm:$0xf]
    %v1481 = vld [vmem:[%s7 + $0xa] sm:$0x1]
    %v1483 = vlaneseq
    %v1484 = vshrl.u32 %v1483, 7
    %v1485 = vsub.s32 0, %v1484
    %v1486 = vrot.slane %v1481, %v1485
    %v1504 = vunpack.c.l.b16 %v1465
    %v1505 = vunpack.c.l.b16 %v1466
    %v1506 = vunpack.c.l.b16 %v1467
    %v1507 = vunpack.c.l.b16 %v1468
    %v1508 = vunpack.c.l.b16 %v1469
    %v1509 = vunpack.c.l.b16 %v1470
    %v1510 = vunpack.c.l.b16 %v1471
    %v1511 = vunpack.c.l.b16 %v1472
    %v1512 = vunpack.c.l.b16 %v1473
    %v1513 = vunpack.c.l.b16 %v1474
    %v1514 = vunpack.c.l.b16 %v1475
    %v1515 = vunpack.c.l.b16 %v1476
    %v1516 = vunpack.c.l.b16 %v1477
    %v1517 = vunpack.c.l.b16 %v1478
    %v1518 = vunpack.c.l.b16 %v1479
    %v1519 = vunpack.c.l.b16 %v1480
    %v1520 = vpack.c.b16 %v1505, %v1504
    %v1521 = vpack.c.b16 %v1507, %v1506
    %v1522 = vpack.c.b16 %v1509, %v1508
    %v1523 = vpack.c.b16 %v1511, %v1510
    %v1524 = vpack.c.b16 %v1513, %v1512
    %v1525 = vpack.c.b16 %v1515, %v1514
    %v1526 = vpack.c.b16 %v1517, %v1516
    %v1527 = vpack.c.b16 %v1519, %v1518
    %1536 = vmatprep.subr.bf16.mxu0 0
    %1537 = vmatpush1.bf16.msra.mxu0 %v1520
    %1538 = vmatprep.subr.bf16.mxu0 0
    %1539 = vmatpush1.bf16.msra.mxu0 %v1521
    %1540 = vmatprep.subr.bf16.mxu0 0
    %1541 = vmatpush1.bf16.msra.mxu0 %v1522
    %1542 = vmatprep.subr.bf16.mxu0 0
    %1543 = vmatpush1.bf16.msra.mxu0 %v1523
    %1544 = vmatprep.subr.bf16.mxu0 0
    %1545 = vmatpush1.bf16.msra.mxu0 %v1524
    %1546 = vmatprep.subr.bf16.mxu0 0
    %1547 = vmatpush1.bf16.msra.mxu0 %v1525
    %1548 = vmatprep.subr.bf16.mxu0 0
    %1549 = vmatpush1.bf16.msra.mxu0 %v1526
    %1550 = vmatprep.subr.bf16.mxu0 0
    %1551 = vmatpush1.bf16.msra.mxu0 %v1527
    %1552 = vmatprep.subr.bf16.mxu0 0
    %1553 = vmatpush1.bf16.msra.mxu0 0
    %1554 = vmatprep.subr.bf16.mxu0 0
    %1555 = vmatpush1.bf16.msra.mxu0 0
    %1556 = vmatprep.subr.bf16.mxu0 0
    %1557 = vmatpush1.bf16.msra.mxu0 0
    %1558 = vmatprep.subr.bf16.mxu0 0
    %1559 = vmatpush1.bf16.msra.mxu0 0
    %1560 = vmatprep.subr.bf16.mxu0 0
    %1561 = vmatpush1.bf16.msra.mxu0 0
    %1562 = vmatprep.subr.bf16.mxu0 0
    %1563 = vmatpush1.bf16.msra.mxu0 0
    %1564 = vmatprep.subr.bf16.mxu0 0
    %1565 = vmatpush1.bf16.msra.mxu0 0
    %1566 = vmatprep.subr.bf16.mxu0 0
    %1567 = vmatpush1.bf16.msra.mxu0 0
    %1568 = vmatprep.mubr.bf16.mxu0 0
    %1569 = vmatmul.mubr.bf16.gmra.mrb[0].mxu0 %v1464
    %v1570 = vpop.f32.mrb[0].mxu0
    %v1571 = vadd.f32 %v1486, %v1570
    %v1572 = vpop.f32.mrb[0].mxu0
    %v1573 = vpop.f32.mrb[0].mxu0
    %v1574 = vpop.f32.mrb[0].mxu0
    %1575 = vdwg.mxu0
    %1576 = vst.msk [vmem:[#allocation10] sm:$0xff] %vm111, %v1571
    // Predicated region
    $region50: #{_forward_impl.1} parent=1 // pred_check
      _
    $region51: #{_forward_impl.1} parent=1 // pred_check_branch
      %1578 = sbr.rel (0) target = $region53
    $region52: #{_forward_impl.1} parent=1 // pred_region
      %s1580 = ssub.s32 128, 128
      %1581 = vsyncadd [#allocation4], %s1580
      %s1583 = sshll.u32 [#allocation10], 4
      %s1584 = int_to_ptr.vmem [resolvable:$true] %s1583
      %1586 = dma.vmem_to_hbm [thread:$0]  %s1584, 128, %s8, [#allocation4]
    $region53: #{_forward_impl.1} parent=1 // pred_fallthru
      _
    // Predicated region
    $region54: #{_forward_impl.1} parent=1 // pred_check
      _
    $region55: #{_forward_impl.1} parent=1 // pred_check_branch
      %1588 = sbr.rel (0) target = $region57
    $region56: #{_forward_impl.1} parent=1 // pred_region
      %1589 = dma.done [#allocation4], 128
    $region57: #{_forward_impl.1} parent=1 // pred_fallthru
      _
    %1590 = vsyncpa [#allocation3], 1
    %1591 = vsyncpa [#allocation6], 1
    %1592 = vsyncpa [#allocation9], 1
    %1593 = vsyncpa [#allocation4], 1

</llo_original>
